<compile_context>
chip_gen: v6e
topology: v6e:2x2x1
jax: 0.10.0
libtpu: 0.0.40
codegen_flags: <defaults>
</compile_context>

<pallas_src>
import jax
import jax.numpy as jnp
from jax.experimental import pallas as pl
from jax.experimental.pallas import tpu as pltpu

EPS = 1e-5
C = 30        # conv channels
K1 = 16       # conv1 kernel size
K2 = 3        # conv2 kernel size
POOL = 4
NCLS = 35
CP = 128      # padded lane width for channels / classes


def _shapes(L):
    L1 = L - K1 + 1          # conv1 output length
    T1 = L1 // POOL          # pool1 output length
    L2 = T1 - K2 + 1         # conv2 output length
    T2 = L2 // POOL          # pool2 output length
    return L1, T1, L2, T2


def _vmem():
    return pl.BlockSpec(memory_space=pltpu.MemorySpace.VMEM)


def _make_kernel(N, L):
    L1, T1, L2, T2 = _shapes(L)
    NL1, NT1 = N * L1, N * T1
    Np = max(8, ((N + 7) // 8) * 8)   # MLP rows padded to a sublane multiple

    def kernel(xw_ref, mask2_ref,
               w1_ref, b1_ref, g1_ref, be1_ref,
               w2_ref, b2_ref, g2_ref, be2_ref,
               wl1_ref, bl1_ref, wl2_ref, bl2_ref, wl3_ref, bl3_ref,
               wl4_ref, bl4_ref, wl5_ref, bl5_ref,
               o_ref, y1_ref, y2_ref):
        f32, bf16 = jnp.float32, jnp.bfloat16

        def bn_relu(a, g, be, cnt, mask=None):
            # Training-mode BatchNorm1d (batch mean, biased variance) fused
            # with ReLU, on the full batched tile; scale/shift precomputed.
            inv_cnt = 1.0 / cnt
            if mask is None:
                mu = jnp.sum(a, axis=0, keepdims=True) * inv_cnt
                d = a - mu
            else:
                mu = jnp.sum(a * mask, axis=0, keepdims=True) * inv_cnt
                d = (a - mu) * mask
            var = jnp.sum(d * d, axis=0, keepdims=True) * inv_cnt
            scale = g * jax.lax.rsqrt(var + EPS)
            shift = be - mu * scale
            return jnp.maximum(a * scale + shift, 0.0)

        # ---- conv1: one batched im2col MXU matmul over all N*L1 rows ----
        a1 = jnp.dot(xw_ref[...], w1_ref[...],
                     preferred_element_type=f32) + b1_ref[...]
        y1_ref[...] = bn_relu(a1, g1_ref[...], be1_ref[...], float(NL1))

        # ---- pool1: strided sublane reads + pairwise VPU max ----
        # L1 % POOL == 0, so stride-4 groups never cross sample boundaries.
        p1 = y1_ref[pl.ds(0, NT1, stride=POOL), :]
        for j in range(1, POOL):
            p1 = jnp.maximum(p1, y1_ref[pl.ds(j, NT1, stride=POOL), :])

        # ---- conv2: taps folded into one (K2*CP)-deep contraction ----
        # Rows whose within-sample index >= L2 are "garbage" (window crosses
        # the sample boundary); they are masked out of BN2 and never pooled.
        shifts = [p1]
        for k in range(1, K2):
            shifts.append(jnp.concatenate(
                [p1[k:, :], jnp.zeros((k, CP), f32)], axis=0))
        win = jnp.concatenate(shifts, axis=-1)            # (NT1, K2*CP)
        a2 = jnp.dot(win.astype(bf16), w2_ref[...],
                     preferred_element_type=f32) + b2_ref[...]
        y2_ref[...] = bn_relu(a2, g2_ref[...], be2_ref[...],
                              float(N * L2), mask2_ref[...])

        # ---- pool2 + channel-major flatten folded into lin1 contraction ----
        # xin[n, t*CP + c] = max_{j<4} y2[n*T1 + 4t + j, c]  (t < T2)
        xts = []
        for t in range(T2):
            xt = y2_ref[pl.ds(POOL * t, N, stride=T1), :]
            for j in range(1, POOL):
                xt = jnp.maximum(
                    xt, y2_ref[pl.ds(POOL * t + j, N, stride=T1), :])
            xts.append(xt)
        xin = jnp.concatenate(xts, axis=-1)               # (N, T2*CP)
        z = jnp.dot(xin.astype(bf16), wl1_ref[...],
                    preferred_element_type=f32) + bl1_ref[...]
        if Np > N:
            z = jnp.concatenate([z, jnp.zeros((Np - N, 128), f32)], axis=0)

        # ---- MLP (bf16 weights, f32 accumulation) + masked log_softmax ----
        h = jnp.tanh(z)
        h = jnp.tanh(jnp.dot(h.astype(bf16), wl2_ref[...],
                             preferred_element_type=f32) + bl2_ref[...])
        h = jnp.tanh(jnp.dot(h.astype(bf16), wl3_ref[...],
                             preferred_element_type=f32) + bl3_ref[...])
        h = jnp.tanh(jnp.dot(h.astype(bf16), wl4_ref[...],
                             preferred_element_type=f32) + bl4_ref[...])
        zc = jnp.dot(h.astype(bf16), wl5_ref[...],
                     preferred_element_type=f32) + bl5_ref[...]
        lane = jax.lax.broadcasted_iota(jnp.int32, zc.shape, 1)
        zc = jnp.where(lane < NCLS, zc, -1e30)            # mask padded classes
        m = jnp.max(zc, axis=1, keepdims=True)
        s = jnp.sum(jnp.exp(zc - m), axis=1, keepdims=True)
        o_ref[...] = zc - m - jnp.log(s)

    return kernel, Np


# ---------------- params (torch layout) + one-time packing ----------------

def init_params(key):
    ks = jax.random.split(key, 20)
    f32 = jnp.float32
    p = {}
    p["w_conv1"] = 0.1 * jax.random.normal(ks[0], (30, 1, 16), f32)
    p["b_conv1"] = 0.1 * jax.random.normal(ks[1], (30,), f32)
    p["g_bn1"] = 1.0 + 0.05 * jax.random.normal(ks[2], (30,), f32)
    p["be_bn1"] = 0.05 * jax.random.normal(ks[3], (30,), f32)
    p["w_conv2"] = 0.1 * jax.random.normal(ks[4], (30, 30, 3), f32)
    p["b_conv2"] = 0.1 * jax.random.normal(ks[5], (30,), f32)
    p["g_bn2"] = 1.0 + 0.05 * jax.random.normal(ks[6], (30,), f32)
    p["be_bn2"] = 0.05 * jax.random.normal(ks[7], (30,), f32)
    p["w_lin1"] = 0.1 * jax.random.normal(ks[8], (128, 90), f32)   # param = 90
    p["b_lin1"] = 0.1 * jax.random.normal(ks[9], (128,), f32)
    p["w_lin2"] = 0.1 * jax.random.normal(ks[10], (64, 128), f32)
    p["b_lin2"] = 0.1 * jax.random.normal(ks[11], (64,), f32)
    p["w_lin3"] = 0.1 * jax.random.normal(ks[12], (128, 64), f32)
    p["b_lin3"] = 0.1 * jax.random.normal(ks[13], (128,), f32)
    p["w_lin4"] = 0.1 * jax.random.normal(ks[14], (256, 128), f32)
    p["b_lin4"] = 0.1 * jax.random.normal(ks[15], (256,), f32)
    p["w_lin5"] = 0.1 * jax.random.normal(ks[16], (35, 256), f32)
    p["b_lin5"] = 0.1 * jax.random.normal(ks[17], (35,), f32)
    return p


def pack_params(p, L):
    """One-time transform of torch-layout params into padded, pre-transposed,
    lane-dense bf16 kernel operands (taps/timesteps folded into contraction)."""
    L1, T1, L2, T2 = _shapes(L)
    assert C * T2 == p["w_lin1"].shape[1], "lin1 in-features must equal 30*T2"
    assert L1 % POOL == 0, "batched dense pooling requires conv1 length % 4 == 0"
    f32, bf16 = jnp.float32, jnp.bfloat16

    def row(v, width=CP):
        return jnp.zeros((1, width), f32).at[0, :v.shape[0]].set(v)

    # conv1: (K1, CP), w1[k, o] = W[o, 0, k]
    w1 = jnp.zeros((K1, CP), f32).at[:, :C].set(p["w_conv1"][:, 0, :].T)

    # conv2 taps folded: (K2*CP, CP), w2f[k*CP + c, o] = W[o, c, k]
    w2t = jnp.transpose(p["w_conv2"], (2, 1, 0))          # (k, cin, cout)
    w2f = jnp.zeros((K2 * CP, CP), f32)
    for k in range(K2):
        w2f = w2f.at[k * CP:k * CP + C, :C].set(w2t[k])

    # lin1 with torch channel-major flatten folded: (T2*CP, 128),
    # wl1f[t*CP + c, o] = W1[o, c*T2 + t]
    w1r = jnp.transpose(p["w_lin1"].reshape(128, C, T2), (2, 1, 0))  # (T2,C,128)
    wl1f = jnp.zeros((T2 * CP, 128), f32)
    for t in range(T2):
        wl1f = wl1f.at[t * CP:t * CP + C, :].set(w1r[t])

    wl2 = jnp.zeros((128, 128), f32).at[:, :64].set(p["w_lin2"].T)
    wl3 = jnp.zeros((128, 128), f32).at[:64, :].set(p["w_lin3"].T)
    wl4 = p["w_lin4"].T.astype(f32)                       # (128, 256)
    wl5 = jnp.zeros((256, 128), f32).at[:, :NCLS].set(p["w_lin5"].T)

    return dict(
        w1=w1.astype(bf16),
        b1=row(p["b_conv1"]), g1=row(p["g_bn1"]), be1=row(p["be_bn1"]),
        w2=w2f.astype(bf16),
        b2=row(p["b_conv2"]), g2=row(p["g_bn2"]), be2=row(p["be_bn2"]),
        wl1=wl1f.astype(bf16), bl1=row(p["b_lin1"]),
        wl2=wl2.astype(bf16), bl2=row(p["b_lin2"]),
        wl3=wl3.astype(bf16), bl3=row(p["b_lin3"]),
        wl4=wl4.astype(bf16), bl4=p["b_lin4"].reshape(1, 256).astype(f32),
        wl5=wl5.astype(bf16), bl5=row(p["b_lin5"]),
    )


# ---------------- forward ----------------

@jax.jit
def m1_forward(packed, x):
    """x: (N, 1, L) float32; mirrors M1.forward (training-mode BatchNorm)."""
    N, _, L = x.shape
    L1, T1, L2, T2 = _shapes(L)
    kernel, Np = _make_kernel(N, L)

    # Host-side glue: tiny im2col for conv1 (N*L1, K1) and the conv2 valid-row
    # mask (N*T1, 1).  Everything else is precomputed in pack_params().
    x2 = x[:, 0, :].astype(jnp.float32)
    xw = jnp.stack([x2[:, k:k + L1] for k in range(K1)], axis=-1)
    xw = xw.reshape(N * L1, K1).astype(jnp.bfloat16)
    mask2 = jnp.tile((jnp.arange(T1) < L2).astype(jnp.float32), N)
    mask2 = mask2.reshape(N * T1, 1)

    args = (xw, mask2,
            packed["w1"], packed["b1"], packed["g1"], packed["be1"],
            packed["w2"], packed["b2"], packed["g2"], packed["be2"],
            packed["wl1"], packed["bl1"], packed["wl2"], packed["bl2"],
            packed["wl3"], packed["bl3"], packed["wl4"], packed["bl4"],
            packed["wl5"], packed["bl5"])

    out = pl.pallas_call(
        kernel,
        out_shape=jax.ShapeDtypeStruct((Np, CP), jnp.float32),
        in_specs=[_vmem() for _ in args],
        out_specs=_vmem(),
        scratch_shapes=[pltpu.VMEM((N * L1, CP), jnp.float32),   # y1 (post bn1/relu)
                        pltpu.VMEM((N * T1, CP), jnp.float32)],  # y2 (post bn2/relu)
        # Single un-gridded call: working set << 1 MiB of VMEM on all of
        # v5e/v6e/v7x.  For large N, grid the batch rows with
        # dimension_semantics=("parallel",) (see TODO at top).
    )(*args)
    return out[:N, :NCLS]


if __name__ == "__main__":
    key = jax.random.PRNGKey(0)
    k_param, k_x = jax.random.split(key)
    raw = init_params(k_param)
    # L=79: conv1 -> 64, pool1 -> 16, conv2 -> 14, pool2 -> 3, flatten -> 90 (= param)
    L = 79
    packed = pack_params(raw, L)
    x = jax.random.normal(k_x, (2, 1, L), jnp.float32)
    y = m1_forward(packed, x)
    jax.block_until_ready(y)
    assert y.shape == (2, NCLS)
    assert bool(jnp.all(jnp.isfinite(y)))
    # log_softmax rows must exponentiate-sum to 1
    assert bool(jnp.allclose(jnp.sum(jnp.exp(y), axis=1), 1.0, atol=1e-3))
    print("KERNEL_OK")
</pallas_src>

<mosaic_0001>
module attributes {stable_mosaic.version = 11 : i64} {
  func.func @kernel(%arg0: memref<128x16xbf16, #tpu.memory_space<vmem>>, %arg1: memref<32x1xf32, #tpu.memory_space<vmem>>, %arg2: memref<16x128xbf16, #tpu.memory_space<vmem>>, %arg3: memref<1x128xf32, #tpu.memory_space<vmem>>, %arg4: memref<1x128xf32, #tpu.memory_space<vmem>>, %arg5: memref<1x128xf32, #tpu.memory_space<vmem>>, %arg6: memref<384x128xbf16, #tpu.memory_space<vmem>>, %arg7: memref<1x128xf32, #tpu.memory_space<vmem>>, %arg8: memref<1x128xf32, #tpu.memory_space<vmem>>, %arg9: memref<1x128xf32, #tpu.memory_space<vmem>>, %arg10: memref<384x128xbf16, #tpu.memory_space<vmem>>, %arg11: memref<1x128xf32, #tpu.memory_space<vmem>>, %arg12: memref<128x128xbf16, #tpu.memory_space<vmem>>, %arg13: memref<1x128xf32, #tpu.memory_space<vmem>>, %arg14: memref<128x128xbf16, #tpu.memory_space<vmem>>, %arg15: memref<1x128xf32, #tpu.memory_space<vmem>>, %arg16: memref<128x256xbf16, #tpu.memory_space<vmem>>, %arg17: memref<1x256xf32, #tpu.memory_space<vmem>>, %arg18: memref<256x128xbf16, #tpu.memory_space<vmem>>, %arg19: memref<1x128xf32, #tpu.memory_space<vmem>>, %arg20: memref<8x128xf32, #tpu.memory_space<vmem>>, %arg21: memref<128x128xf32, #tpu.memory_space<vmem>>, %arg22: memref<32x128xf32, #tpu.memory_space<vmem>>) attributes {dimension_semantics = [], scalar_prefetch = 0 : i64, scratch_operands = 2 : i64, tpu.core_type = #tpu.core_type<tc>} {
    %c0 = arith.constant 0 : index
    %c0_0 = arith.constant 0 : index
    %0 = vector.load %arg0[%c0, %c0_0] : memref<128x16xbf16, #tpu.memory_space<vmem>>, vector<128x16xbf16>
    %c0_1 = arith.constant 0 : index
    %c0_2 = arith.constant 0 : index
    %1 = vector.load %arg2[%c0_1, %c0_2] : memref<16x128xbf16, #tpu.memory_space<vmem>>, vector<16x128xbf16>
    %cst = arith.constant dense<0.000000e+00> : vector<128x128xf32>
    %2 = tpu.matmul %0, %1, %cst {dimension_numbers = #tpu.dot_dimension_numbers<[1], [0], [0], [1], [0, 0, 1, 1], [], []>} : vector<128x16xbf16>, vector<16x128xbf16>, vector<128x128xf32> -> vector<128x128xf32>
    %c0_3 = arith.constant 0 : index
    %c0_4 = arith.constant 0 : index
    %3 = vector.load %arg3[%c0_3, %c0_4] : memref<1x128xf32, #tpu.memory_space<vmem>>, vector<1x128xf32>
    %4 = vector.broadcast %3 : vector<1x128xf32> to vector<128x128xf32>
    %5 = arith.addf %2, %4 : vector<128x128xf32>
    %c0_5 = arith.constant 0 : index
    %c0_6 = arith.constant 0 : index
    %6 = vector.load %arg4[%c0_5, %c0_6] : memref<1x128xf32, #tpu.memory_space<vmem>>, vector<1x128xf32>
    %c0_7 = arith.constant 0 : index
    %c0_8 = arith.constant 0 : index
    %7 = vector.load %arg5[%c0_7, %c0_8] : memref<1x128xf32, #tpu.memory_space<vmem>>, vector<1x128xf32>
    %cst_9 = arith.constant dense<0.000000e+00> : vector<128xf32>
    %8 = vector.multi_reduction <add>, %5, %cst_9 [0] : vector<128x128xf32> to vector<128xf32>
    %9 = vector.shape_cast %8 : vector<128xf32> to vector<1x128xf32>
    %cst_10 = arith.constant 7.812500e-03 : f32
    %10 = vector.broadcast %cst_10 : f32 to vector<1x128xf32>
    %11 = arith.mulf %9, %10 : vector<1x128xf32>
    %12 = vector.broadcast %11 : vector<1x128xf32> to vector<128x128xf32>
    %13 = arith.subf %5, %12 : vector<128x128xf32>
    %14 = arith.mulf %13, %13 : vector<128x128xf32>
    %cst_11 = arith.constant dense<0.000000e+00> : vector<128xf32>
    %15 = vector.multi_reduction <add>, %14, %cst_11 [0] : vector<128x128xf32> to vector<128xf32>
    %16 = vector.shape_cast %15 : vector<128xf32> to vector<1x128xf32>
    %cst_12 = arith.constant 7.812500e-03 : f32
    %17 = vector.broadcast %cst_12 : f32 to vector<1x128xf32>
    %18 = arith.mulf %16, %17 : vector<1x128xf32>
    %cst_13 = arith.constant 9.99999974E-6 : f32
    %19 = vector.broadcast %cst_13 : f32 to vector<1x128xf32>
    %20 = arith.addf %18, %19 : vector<1x128xf32>
    %21 = math.rsqrt %20 : vector<1x128xf32>
    %22 = arith.mulf %6, %21 : vector<1x128xf32>
    %23 = arith.mulf %11, %22 : vector<1x128xf32>
    %24 = arith.subf %7, %23 : vector<1x128xf32>
    %25 = vector.broadcast %22 : vector<1x128xf32> to vector<128x128xf32>
    %26 = arith.mulf %5, %25 : vector<128x128xf32>
    %27 = vector.broadcast %24 : vector<1x128xf32> to vector<128x128xf32>
    %28 = arith.addf %26, %27 : vector<128x128xf32>
    %cst_14 = arith.constant 0.000000e+00 : f32
    %29 = vector.broadcast %cst_14 : f32 to vector<128x128xf32>
    %30 = arith.maximumf %28, %29 : vector<128x128xf32>
    %c0_15 = arith.constant 0 : index
    %c0_16 = arith.constant 0 : index
    %31 = vector.load %arg21[%c0_15, %c0_16] : memref<128x128xf32, #tpu.memory_space<vmem>>, vector<128x128xf32>
    tpu.vector_store %arg21[%c0_15, %c0_16], %30 {strides = array<i32>} : memref<128x128xf32, #tpu.memory_space<vmem>>, vector<128x128xf32>,
    %c0_17 = arith.constant 0 : index
    %c0_18 = arith.constant 0 : index
    %32 = tpu.strided_load %arg21[%c0_17, %c0_18] {strides = array<i32: 4, 1>} : memref<128x128xf32, #tpu.memory_space<vmem>>, vector<32x128xf32>
    %c1 = arith.constant 1 : index
    %c0_19 = arith.constant 0 : index
    %33 = tpu.strided_load %arg21[%c1, %c0_19] {strides = array<i32: 4, 1>} : memref<128x128xf32, #tpu.memory_space<vmem>>, vector<32x128xf32>
    %34 = arith.maximumf %32, %33 : vector<32x128xf32>
    %c2 = arith.constant 2 : index
    %c0_20 = arith.constant 0 : index
    %35 = tpu.strided_load %arg21[%c2, %c0_20] {strides = array<i32: 4, 1>} : memref<128x128xf32, #tpu.memory_space<vmem>>, vector<32x128xf32>
    %36 = arith.maximumf %34, %35 : vector<32x128xf32>
    %c3 = arith.constant 3 : index
    %c0_21 = arith.constant 0 : index
    %37 = tpu.strided_load %arg21[%c3, %c0_21] {strides = array<i32: 4, 1>} : memref<128x128xf32, #tpu.memory_space<vmem>>, vector<32x128xf32>
    %38 = arith.maximumf %36, %37 : vector<32x128xf32>
    %39 = vector.extract_strided_slice %38 {offsets = [1, 0], sizes = [31, 128], strides = [1, 1]} : vector<32x128xf32> to vector<31x128xf32>
    %cst_22 = arith.constant 0.000000e+00 : f32
    %40 = vector.broadcast %cst_22 : f32 to vector<1x128xf32>
    %41 = tpu.concatenate %39, %40 in 0 : vector<31x128xf32>, vector<1x128xf32> -> vector<32x128xf32>
    %42 = vector.extract_strided_slice %38 {offsets = [2, 0], sizes = [30, 128], strides = [1, 1]} : vector<32x128xf32> to vector<30x128xf32>
    %cst_23 = arith.constant 0.000000e+00 : f32
    %43 = vector.broadcast %cst_23 : f32 to vector<2x128xf32>
    %44 = tpu.concatenate %42, %43 in 0 : vector<30x128xf32>, vector<2x128xf32> -> vector<32x128xf32>
    %45 = tpu.concatenate %38, %41, %44 in 1 : vector<32x128xf32>, vector<32x128xf32>, vector<32x128xf32> -> vector<32x384xf32>
    %46 = arith.truncf %45 : vector<32x384xf32> to vector<32x384xbf16>
    %c0_24 = arith.constant 0 : index
    %c0_25 = arith.constant 0 : index
    %47 = vector.load %arg6[%c0_24, %c0_25] : memref<384x128xbf16, #tpu.memory_space<vmem>>, vector<384x128xbf16>
    %cst_26 = arith.constant dense<0.000000e+00> : vector<32x128xf32>
    %48 = tpu.matmul %46, %47, %cst_26 {dimension_numbers = #tpu.dot_dimension_numbers<[1], [0], [0], [1], [0, 0, 1, 1], [], []>} : vector<32x384xbf16>, vector<384x128xbf16>, vector<32x128xf32> -> vector<32x128xf32>
    %c0_27 = arith.constant 0 : index
    %c0_28 = arith.constant 0 : index
    %49 = vector.load %arg7[%c0_27, %c0_28] : memref<1x128xf32, #tpu.memory_space<vmem>>, vector<1x128xf32>
    %50 = vector.broadcast %49 : vector<1x128xf32> to vector<32x128xf32>
    %51 = arith.addf %48, %50 : vector<32x128xf32>
    %c0_29 = arith.constant 0 : index
    %c0_30 = arith.constant 0 : index
    %52 = vector.load %arg8[%c0_29, %c0_30] : memref<1x128xf32, #tpu.memory_space<vmem>>, vector<1x128xf32>
    %c0_31 = arith.constant 0 : index
    %c0_32 = arith.constant 0 : index
    %53 = vector.load %arg9[%c0_31, %c0_32] : memref<1x128xf32, #tpu.memory_space<vmem>>, vector<1x128xf32>
    %c0_33 = arith.constant 0 : index
    %c0_34 = arith.constant 0 : index
    %54 = vector.load %arg1[%c0_33, %c0_34] : memref<32x1xf32, #tpu.memory_space<vmem>>, vector<32x1xf32>
    %55 = vector.broadcast %54 : vector<32x1xf32> to vector<32x128xf32>
    %56 = arith.mulf %51, %55 : vector<32x128xf32>
    %cst_35 = arith.constant dense<0.000000e+00> : vector<128xf32>
    %57 = vector.multi_reduction <add>, %56, %cst_35 [0] : vector<32x128xf32> to vector<128xf32>
    %58 = vector.shape_cast %57 : vector<128xf32> to vector<1x128xf32>
    %cst_36 = arith.constant 0.0357142873 : f32
    %59 = vector.broadcast %cst_36 : f32 to vector<1x128xf32>
    %60 = arith.mulf %58, %59 : vector<1x128xf32>
    %61 = vector.broadcast %60 : vector<1x128xf32> to vector<32x128xf32>
    %62 = arith.subf %51, %61 : vector<32x128xf32>
    %63 = vector.broadcast %54 : vector<32x1xf32> to vector<32x128xf32>
    %64 = arith.mulf %62, %63 : vector<32x128xf32>
    %65 = arith.mulf %64, %64 : vector<32x128xf32>
    %cst_37 = arith.constant dense<0.000000e+00> : vector<128xf32>
    %66 = vector.multi_reduction <add>, %65, %cst_37 [0] : vector<32x128xf32> to vector<128xf32>
    %67 = vector.shape_cast %66 : vector<128xf32> to vector<1x128xf32>
    %cst_38 = arith.constant 0.0357142873 : f32
    %68 = vector.broadcast %cst_38 : f32 to vector<1x128xf32>
    %69 = arith.mulf %67, %68 : vector<1x128xf32>
    %cst_39 = arith.constant 9.99999974E-6 : f32
    %70 = vector.broadcast %cst_39 : f32 to vector<1x128xf32>
    %71 = arith.addf %69, %70 : vector<1x128xf32>
    %72 = math.rsqrt %71 : vector<1x128xf32>
    %73 = arith.mulf %52, %72 : vector<1x128xf32>
    %74 = arith.mulf %60, %73 : vector<1x128xf32>
    %75 = arith.subf %53, %74 : vector<1x128xf32>
    %76 = vector.broadcast %73 : vector<1x128xf32> to vector<32x128xf32>
    %77 = arith.mulf %51, %76 : vector<32x128xf32>
    %78 = vector.broadcast %75 : vector<1x128xf32> to vector<32x128xf32>
    %79 = arith.addf %77, %78 : vector<32x128xf32>
    %cst_40 = arith.constant 0.000000e+00 : f32
    %80 = vector.broadcast %cst_40 : f32 to vector<32x128xf32>
    %81 = arith.maximumf %79, %80 : vector<32x128xf32>
    %c0_41 = arith.constant 0 : index
    %c0_42 = arith.constant 0 : index
    %82 = vector.load %arg22[%c0_41, %c0_42] : memref<32x128xf32, #tpu.memory_space<vmem>>, vector<32x128xf32>
    tpu.vector_store %arg22[%c0_41, %c0_42], %81 {strides = array<i32>} : memref<32x128xf32, #tpu.memory_space<vmem>>, vector<32x128xf32>,
    %c0_43 = arith.constant 0 : index
    %c0_44 = arith.constant 0 : index
    %83 = tpu.strided_load %arg22[%c0_43, %c0_44] {strides = array<i32: 16, 1>} : memref<32x128xf32, #tpu.memory_space<vmem>>, vector<2x128xf32>
    %c1_45 = arith.constant 1 : index
    %c0_46 = arith.constant 0 : index
    %84 = tpu.strided_load %arg22[%c1_45, %c0_46] {strides = array<i32: 16, 1>} : memref<32x128xf32, #tpu.memory_space<vmem>>, vector<2x128xf32>
    %85 = arith.maximumf %83, %84 : vector<2x128xf32>
    %c2_47 = arith.constant 2 : index
    %c0_48 = arith.constant 0 : index
    %86 = tpu.strided_load %arg22[%c2_47, %c0_48] {strides = array<i32: 16, 1>} : memref<32x128xf32, #tpu.memory_space<vmem>>, vector<2x128xf32>
    %87 = arith.maximumf %85, %86 : vector<2x128xf32>
    %c3_49 = arith.constant 3 : index
    %c0_50 = arith.constant 0 : index
    %88 = tpu.strided_load %arg22[%c3_49, %c0_50] {strides = array<i32: 16, 1>} : memref<32x128xf32, #tpu.memory_space<vmem>>, vector<2x128xf32>
    %89 = arith.maximumf %87, %88 : vector<2x128xf32>
    %c4 = arith.constant 4 : index
    %c0_51 = arith.constant 0 : index
    %90 = tpu.strided_load %arg22[%c4, %c0_51] {strides = array<i32: 16, 1>} : memref<32x128xf32, #tpu.memory_space<vmem>>, vector<2x128xf32>
    %c5 = arith.constant 5 : index
    %c0_52 = arith.constant 0 : index
    %91 = tpu.strided_load %arg22[%c5, %c0_52] {strides = array<i32: 16, 1>} : memref<32x128xf32, #tpu.memory_space<vmem>>, vector<2x128xf32>
    %92 = arith.maximumf %90, %91 : vector<2x128xf32>
    %c6 = arith.constant 6 : index
    %c0_53 = arith.constant 0 : index
    %93 = tpu.strided_load %arg22[%c6, %c0_53] {strides = array<i32: 16, 1>} : memref<32x128xf32, #tpu.memory_space<vmem>>, vector<2x128xf32>
    %94 = arith.maximumf %92, %93 : vector<2x128xf32>
    %c7 = arith.constant 7 : index
    %c0_54 = arith.constant 0 : index
    %95 = tpu.strided_load %arg22[%c7, %c0_54] {strides = array<i32: 16, 1>} : memref<32x128xf32, #tpu.memory_space<vmem>>, vector<2x128xf32>
    %96 = arith.maximumf %94, %95 : vector<2x128xf32>
    %c8 = arith.constant 8 : index
    %c0_55 = arith.constant 0 : index
    %97 = tpu.strided_load %arg22[%c8, %c0_55] {strides = array<i32: 16, 1>} : memref<32x128xf32, #tpu.memory_space<vmem>>, vector<2x128xf32>
    %c9 = arith.constant 9 : index
    %c0_56 = arith.constant 0 : index
    %98 = tpu.strided_load %arg22[%c9, %c0_56] {strides = array<i32: 16, 1>} : memref<32x128xf32, #tpu.memory_space<vmem>>, vector<2x128xf32>
    %99 = arith.maximumf %97, %98 : vector<2x128xf32>
    %c10 = arith.constant 10 : index
    %c0_57 = arith.constant 0 : index
    %100 = tpu.strided_load %arg22[%c10, %c0_57] {strides = array<i32: 16, 1>} : memref<32x128xf32, #tpu.memory_space<vmem>>, vector<2x128xf32>
    %101 = arith.maximumf %99, %100 : vector<2x128xf32>
    %c11 = arith.constant 11 : index
    %c0_58 = arith.constant 0 : index
    %102 = tpu.strided_load %arg22[%c11, %c0_58] {strides = array<i32: 16, 1>} : memref<32x128xf32, #tpu.memory_space<vmem>>, vector<2x128xf32>
    %103 = arith.maximumf %101, %102 : vector<2x128xf32>
    %104 = tpu.concatenate %89, %96, %103 in 1 : vector<2x128xf32>, vector<2x128xf32>, vector<2x128xf32> -> vector<2x384xf32>
    %105 = arith.truncf %104 : vector<2x384xf32> to vector<2x384xbf16>
    %c0_59 = arith.constant 0 : index
    %c0_60 = arith.constant 0 : index
    %106 = vector.load %arg10[%c0_59, %c0_60] : memref<384x128xbf16, #tpu.memory_space<vmem>>, vector<384x128xbf16>
    %cst_61 = arith.constant dense<0.000000e+00> : vector<2x128xf32>
    %107 = tpu.matmul %105, %106, %cst_61 {dimension_numbers = #tpu.dot_dimension_numbers<[1], [0], [0], [1], [0, 0, 1, 1], [], []>} : vector<2x384xbf16>, vector<384x128xbf16>, vector<2x128xf32> -> vector<2x128xf32>
    %c0_62 = arith.constant 0 : index
    %c0_63 = arith.constant 0 : index
    %108 = vector.load %arg11[%c0_62, %c0_63] : memref<1x128xf32, #tpu.memory_space<vmem>>, vector<1x128xf32>
    %109 = vector.broadcast %108 : vector<1x128xf32> to vector<2x128xf32>
    %110 = arith.addf %107, %109 : vector<2x128xf32>
    %cst_64 = arith.constant 0.000000e+00 : f32
    %111 = vector.broadcast %cst_64 : f32 to vector<6x128xf32>
    %112 = tpu.concatenate %110, %111 in 0 : vector<2x128xf32>, vector<6x128xf32> -> vector<8x128xf32>
    %113 = math.tanh %112 : vector<8x128xf32>
    %114 = arith.truncf %113 : vector<8x128xf32> to vector<8x128xbf16>
    %c0_65 = arith.constant 0 : index
    %c0_66 = arith.constant 0 : index
    %115 = vector.load %arg12[%c0_65, %c0_66] : memref<128x128xbf16, #tpu.memory_space<vmem>>, vector<128x128xbf16>
    %cst_67 = arith.constant dense<0.000000e+00> : vector<8x128xf32>
    %116 = tpu.matmul %114, %115, %cst_67 {dimension_numbers = #tpu.dot_dimension_numbers<[1], [0], [0], [1], [0, 0, 1, 1], [], []>} : vector<8x128xbf16>, vector<128x128xbf16>, vector<8x128xf32> -> vector<8x128xf32>
    %c0_68 = arith.constant 0 : index
    %c0_69 = arith.constant 0 : index
    %117 = vector.load %arg13[%c0_68, %c0_69] : memref<1x128xf32, #tpu.memory_space<vmem>>, vector<1x128xf32>
    %118 = vector.broadcast %117 : vector<1x128xf32> to vector<8x128xf32>
    %119 = arith.addf %116, %118 : vector<8x128xf32>
    %120 = math.tanh %119 : vector<8x128xf32>
    %121 = arith.truncf %120 : vector<8x128xf32> to vector<8x128xbf16>
    %c0_70 = arith.constant 0 : index
    %c0_71 = arith.constant 0 : index
    %122 = vector.load %arg14[%c0_70, %c0_71] : memref<128x128xbf16, #tpu.memory_space<vmem>>, vector<128x128xbf16>
    %cst_72 = arith.constant dense<0.000000e+00> : vector<8x128xf32>
    %123 = tpu.matmul %121, %122, %cst_72 {dimension_numbers = #tpu.dot_dimension_numbers<[1], [0], [0], [1], [0, 0, 1, 1], [], []>} : vector<8x128xbf16>, vector<128x128xbf16>, vector<8x128xf32> -> vector<8x128xf32>
    %c0_73 = arith.constant 0 : index
    %c0_74 = arith.constant 0 : index
    %124 = vector.load %arg15[%c0_73, %c0_74] : memref<1x128xf32, #tpu.memory_space<vmem>>, vector<1x128xf32>
    %125 = vector.broadcast %124 : vector<1x128xf32> to vector<8x128xf32>
    %126 = arith.addf %123, %125 : vector<8x128xf32>
    %127 = math.tanh %126 : vector<8x128xf32>
    %128 = arith.truncf %127 : vector<8x128xf32> to vector<8x128xbf16>
    %c0_75 = arith.constant 0 : index
    %c0_76 = arith.constant 0 : index
    %129 = vector.load %arg16[%c0_75, %c0_76] : memref<128x256xbf16, #tpu.memory_space<vmem>>, vector<128x256xbf16>
    %cst_77 = arith.constant dense<0.000000e+00> : vector<8x256xf32>
    %130 = tpu.matmul %128, %129, %cst_77 {dimension_numbers = #tpu.dot_dimension_numbers<[1], [0], [0], [1], [0, 0, 1, 1], [], []>} : vector<8x128xbf16>, vector<128x256xbf16>, vector<8x256xf32> -> vector<8x256xf32>
    %c0_78 = arith.constant 0 : index
    %c0_79 = arith.constant 0 : index
    %131 = vector.load %arg17[%c0_78, %c0_79] : memref<1x256xf32, #tpu.memory_space<vmem>>, vector<1x256xf32>
    %132 = vector.broadcast %131 : vector<1x256xf32> to vector<8x256xf32>
    %133 = arith.addf %130, %132 : vector<8x256xf32>
    %134 = math.tanh %133 : vector<8x256xf32>
    %135 = arith.truncf %134 : vector<8x256xf32> to vector<8x256xbf16>
    %c0_80 = arith.constant 0 : index
    %c0_81 = arith.constant 0 : index
    %136 = vector.load %arg18[%c0_80, %c0_81] : memref<256x128xbf16, #tpu.memory_space<vmem>>, vector<256x128xbf16>
    %cst_82 = arith.constant dense<0.000000e+00> : vector<8x128xf32>
    %137 = tpu.matmul %135, %136, %cst_82 {dimension_numbers = #tpu.dot_dimension_numbers<[1], [0], [0], [1], [0, 0, 1, 1], [], []>} : vector<8x256xbf16>, vector<256x128xbf16>, vector<8x128xf32> -> vector<8x128xf32>
    %c0_83 = arith.constant 0 : index
    %c0_84 = arith.constant 0 : index
    %138 = vector.load %arg19[%c0_83, %c0_84] : memref<1x128xf32, #tpu.memory_space<vmem>>, vector<1x128xf32>
    %139 = vector.broadcast %138 : vector<1x128xf32> to vector<8x128xf32>
    %140 = arith.addf %137, %139 : vector<8x128xf32>
    %141 = tpu.iota {dimensions = array<i32: 1>} : vector<8x128xi32>
    %c35_i32 = arith.constant 35 : i32
    %142 = vector.broadcast %c35_i32 : i32 to vector<8x128xi32>
    %143 = arith.cmpi slt, %141, %142 : vector<8x128xi32>
    %cst_85 = arith.constant -1.000000e+30 : f32
    %144 = vector.broadcast %cst_85 : f32 to vector<8x128xf32>
    %145 = arith.select %143, %140, %144 : vector<8x128xi1>, vector<8x128xf32>
    %cst_86 = arith.constant dense<0xFF800000> : vector<8xf32>
    %146 = vector.multi_reduction <maximumf>, %145, %cst_86 [1] : vector<8x128xf32> to vector<8xf32>
    %147 = vector.shape_cast %146 : vector<8xf32> to vector<8x1xf32>
    %148 = vector.broadcast %147 : vector<8x1xf32> to vector<8x128xf32>
    %149 = arith.subf %145, %148 : vector<8x128xf32>
    %150 = math.exp %149 : vector<8x128xf32>
    %cst_87 = arith.constant dense<0.000000e+00> : vector<8xf32>
    %151 = vector.multi_reduction <add>, %150, %cst_87 [1] : vector<8x128xf32> to vector<8xf32>
    %152 = vector.shape_cast %151 : vector<8xf32> to vector<8x1xf32>
    %153 = vector.broadcast %147 : vector<8x1xf32> to vector<8x128xf32>
    %154 = arith.subf %145, %153 : vector<8x128xf32>
    %155 = math.log %152 : vector<8x1xf32>
    %156 = vector.broadcast %155 : vector<8x1xf32> to vector<8x128xf32>
    %157 = arith.subf %154, %156 : vector<8x128xf32>
    %c0_88 = arith.constant 0 : index
    %c0_89 = arith.constant 0 : index
    %158 = vector.load %arg20[%c0_88, %c0_89] : memref<8x128xf32, #tpu.memory_space<vmem>>, vector<8x128xf32>
    tpu.vector_store %arg20[%c0_88, %c0_89], %157 {strides = array<i32>} : memref<8x128xf32, #tpu.memory_space<vmem>>, vector<8x128xf32>,
    return
  }
}

</mosaic_0001>

<llo_original>
// kernel: tile.8
$region0: #{tile.8}
  #allocation0 [shape = 's32[1]{0}', space=sflag, size = 0x4, scoped, tag = 'scoped memory for tile.8']
  %s0 = inlined_call_operand.vmem [shape: f32[16], index: 0, kind: input, shape index: {}]
  %s1 = inlined_call_operand.vmem [shape: f32[2,16], index: 1, kind: output, shape index: {}]
  // Predicated region
  $region2: #{tile.8} parent=0 // pred_check
    _
  $region3: #{tile.8} parent=0 // pred_check_branch
    %3 = sbr.rel (0) target = $region5
  $region4: #{tile.8} parent=0 // pred_region
    _
  $region5: #{tile.8} parent=0 // pred_fallthru
    _
  %v4 = vld [vmem:[%s0] ss:$0 sm:$0xff]
  %5 = vst [vmem:[%s1] sm:$0x3] %v4

// kernel: tile.0
$region0: #{tile.0}
  %s0 = inlined_call_operand.vmem [shape: f32[2,16], index: 0, kind: input, shape index: {}]
  %s1 = inlined_call_operand.vmem [shape: f32[32,1], index: 1, kind: output, shape index: {}]
  $region1: #{tile.0} parent=0
    #allocation0 [shape = 'u8[4096]{0}', space=vmem, size = 0x1000, scoped, tag = 'scoped mem for input reshape']
    %s3 = sshll.u32 1, 2
    %s4 = ssub.s32 %s3, 1
    %v5 = vld [vmem:[%s0] sm:%s4]
    %6 = vst [vmem:[#allocation0] sm:%s4] %v5
    %v7 = vld [vmem:[#allocation0] sm:$0x3]
    %vm8 = vcmask 7168
    %9 = vst.msk [vmem:[%s1] ss:$16 sm:$0x3] %vm8, %v7
    %v10 = vld [vmem:[#allocation0] sm:$0x3]
    %11 = vrot.lane.b32.xlu0 %v10, 127
    %v12 = vpop.permute.xlu0 %11
    %vm13 = vcmask 7168
    %s14 = scalar_lea.vmem %s1, 1
    %15 = vst.msk [vmem:[%s14] ss:$16 sm:$0x3] %vm13, %v12
    %v16 = vld [vmem:[#allocation0] sm:$0x3]
    %17 = vrot.lane.b32.xlu0 %v16, 126
    %v18 = vpop.permute.xlu0 %17
    %vm19 = vcmask 7168
    %s20 = scalar_lea.vmem %s1, 2
    %21 = vst.msk [vmem:[%s20] ss:$16 sm:$0x3] %vm19, %v18
    %v22 = vld [vmem:[#allocation0] sm:$0x3]
    %23 = vrot.lane.b32.xlu0 %v22, 125
    %v24 = vpop.permute.xlu0 %23
    %vm25 = vcmask 7168
    %s26 = scalar_lea.vmem %s1, 3
    %27 = vst.msk [vmem:[%s26] ss:$16 sm:$0x3] %vm25, %v24
    %v28 = vld [vmem:[#allocation0] sm:$0x3]
    %29 = vrot.lane.b32.xlu0 %v28, 124
    %v30 = vpop.permute.xlu0 %29
    %vm31 = vcmask 7168
    %s32 = scalar_lea.vmem %s1, 4
    %33 = vst.msk [vmem:[%s32] ss:$16 sm:$0x3] %vm31, %v30
    %v34 = vld [vmem:[#allocation0] sm:$0x3]
    %35 = vrot.lane.b32.xlu0 %v34, 123
    %v36 = vpop.permute.xlu0 %35
    %vm37 = vcmask 7168
    %s38 = scalar_lea.vmem %s1, 5
    %39 = vst.msk [vmem:[%s38] ss:$16 sm:$0x3] %vm37, %v36
    %v40 = vld [vmem:[#allocation0] sm:$0x3]
    %41 = vrot.lane.b32.xlu0 %v40, 122
    %v42 = vpop.permute.xlu0 %41
    %vm43 = vcmask 7168
    %s44 = scalar_lea.vmem %s1, 6
    %45 = vst.msk [vmem:[%s44] ss:$16 sm:$0x3] %vm43, %v42
    %v46 = vld [vmem:[#allocation0] sm:$0x3]
    %47 = vrot.lane.b32.xlu0 %v46, 121
    %v48 = vpop.permute.xlu0 %47
    %vm49 = vcmask 7168
    %s50 = scalar_lea.vmem %s1, 7
    %51 = vst.msk [vmem:[%s50] ss:$16 sm:$0x3] %vm49, %v48
    %v52 = vld [vmem:[#allocation0] sm:$0x3]
    %53 = vrot.lane.b32.xlu0 %v52, 120
    %v54 = vpop.permute.xlu0 %53
    %vm55 = vcmask 7168
    %s56 = scalar_lea.vmem %s1, 8
    %57 = vst.msk [vmem:[%s56] ss:$16 sm:$0x3] %vm55, %v54
    %v58 = vld [vmem:[#allocation0] sm:$0x3]
    %59 = vrot.lane.b32.xlu0 %v58, 119
    %v60 = vpop.permute.xlu0 %59
    %vm61 = vcmask 7168
    %s62 = scalar_lea.vmem %s1, 9
    %63 = vst.msk [vmem:[%s62] ss:$16 sm:$0x3] %vm61, %v60
    %v64 = vld [vmem:[#allocation0] sm:$0x3]
    %65 = vrot.lane.b32.xlu0 %v64, 118
    %v66 = vpop.permute.xlu0 %65
    %vm67 = vcmask 7168
    %s68 = scalar_lea.vmem %s1, 10
    %69 = vst.msk [vmem:[%s68] ss:$16 sm:$0x3] %vm67, %v66
    %v70 = vld [vmem:[#allocation0] sm:$0x3]
    %71 = vrot.lane.b32.xlu0 %v70, 117
    %v72 = vpop.permute.xlu0 %71
    %vm73 = vcmask 7168
    %s74 = scalar_lea.vmem %s1, 11
    %75 = vst.msk [vmem:[%s74] ss:$16 sm:$0x3] %vm73, %v72
    %v76 = vld [vmem:[#allocation0] sm:$0x3]
    %77 = vrot.lane.b32.xlu0 %v76, 116
    %v78 = vpop.permute.xlu0 %77
    %vm79 = vcmask 7168
    %s80 = scalar_lea.vmem %s1, 12
    %81 = vst.msk [vmem:[%s80] ss:$16 sm:$0x3] %vm79, %v78
    %v82 = vld [vmem:[#allocation0] sm:$0x3]
    %83 = vrot.lane.b32.xlu0 %v82, 115
    %v84 = vpop.permute.xlu0 %83
    %vm85 = vcmask 7168
    %s86 = scalar_lea.vmem %s1, 13
    %87 = vst.msk [vmem:[%s86] ss:$16 sm:$0x3] %vm85, %v84
    %v88 = vld [vmem:[#allocation0] sm:$0x3]
    %89 = vrot.lane.b32.xlu0 %v88, 114
    %v90 = vpop.permute.xlu0 %89
    %vm91 = vcmask 7168
    %s92 = scalar_lea.vmem %s1, 14
    %93 = vst.msk [vmem:[%s92] ss:$16 sm:$0x3] %vm91, %v90
    %v94 = vld [vmem:[#allocation0] sm:$0x3]
    %95 = vrot.lane.b32.xlu0 %v94, 113
    %v96 = vpop.permute.xlu0 %95
    %vm97 = vcmask 7168
    %s98 = scalar_lea.vmem %s1, 15
    %99 = vst.msk [vmem:[%s98] ss:$16 sm:$0x3] %vm97, %v96

// kernel: m1_forward.1
$region0: #{m1_forward.1}
  #allocation0 [shape = 'u32[]', space=smem, size = 0x4, offset = 0x4, fixed_abs, tag = 'smem constant byte address 0x4 - core index']
  #allocation1 [shape = 'u32[144,128]{1,0:T(1,128)}', space=vmem, size = 0x12000, scoped, tag = 'internal scratch']
  #allocation2 [shape = 'f32[128,128]{1,0:T(8,128)}', space=vmem, size = 0x10000, scoped, tag = 'scratch operand']
  #allocation3 [shape = 'f32[32,128]{1,0:T(8,128)}', space=vmem, size = 0x4000, scoped, tag = 'scratch operand']
  %s0 = inlined_call_operand.vmem [shape: bf16[128,16], index: 0, kind: input, shape index: {}]
  %s1 = inlined_call_operand.vmem [shape: f32[32,1], index: 1, kind: input, shape index: {}]
  %s2 = inlined_call_operand.hbm [shape: bf16[16,128], index: 2, kind: input, shape index: {}]
  %s3 = inlined_call_operand.hbm [shape: f32[1,128], index: 3, kind: input, shape index: {}]
  %s4 = inlined_call_operand.hbm [shape: f32[1,128], index: 4, kind: input, shape index: {}]
  %s5 = inlined_call_operand.hbm [shape: f32[1,128], index: 5, kind: input, shape index: {}]
  %s6 = inlined_call_operand.vmem [shape: bf16[384,128], index: 6, kind: input, shape index: {}]
  %s7 = inlined_call_operand.hbm [shape: f32[1,128], index: 7, kind: input, shape index: {}]
  %s8 = inlined_call_operand.hbm [shape: f32[1,128], index: 8, kind: input, shape index: {}]
  %s9 = inlined_call_operand.hbm [shape: f32[1,128], index: 9, kind: input, shape index: {}]
  %s10 = inlined_call_operand.hbm [shape: bf16[384,128], index: 10, kind: input, shape index: {}]
  %s11 = inlined_call_operand.hbm [shape: f32[1,128], index: 11, kind: input, shape index: {}]
  %s12 = inlined_call_operand.vmem [shape: bf16[128,128], index: 12, kind: input, shape index: {}]
  %s13 = inlined_call_operand.hbm [shape: f32[1,128], index: 13, kind: input, shape index: {}]
  %s14 = inlined_call_operand.hbm [shape: bf16[128,128], index: 14, kind: input, shape index: {}]
  %s15 = inlined_call_operand.hbm [shape: f32[1,128], index: 15, kind: input, shape index: {}]
  %s16 = inlined_call_operand.hbm [shape: bf16[128,256], index: 16, kind: input, shape index: {}]
  %s17 = inlined_call_operand.hbm [shape: f32[1,256], index: 17, kind: input, shape index: {}]
  %s18 = inlined_call_operand.hbm [shape: bf16[256,128], index: 18, kind: input, shape index: {}]
  %s19 = inlined_call_operand.hbm [shape: f32[1,128], index: 19, kind: input, shape index: {}]
  %s20 = inlined_call_operand.vmem [shape: f32[8,128], index: 20, kind: output, shape index: {}]
  %s21 = sld [smem:[#allocation0]]
  $region154: #{m1_forward.1} parent=0
    _
  %s23 = ssub.s32 1, %s21
  %s24 = scalar_select 0, %s23, %s21
  $region1: #{m1_forward.1} parent=0
    #allocation4 [shape = 'u8[4096]{0}', space=vmem, size = 0x1000, scoped, tag = 'input window, operand 2, single buffered']
    #allocation5 [shape = 's32[1]{0}', space=sflag, size = 0x4, scoped, tag = 'scoped memory for m1_forward.1']
    #allocation6 [shape = 'u8[512]{0}', space=vmem, size = 0x400, scoped, tag = 'input window, operand 3, single buffered']
    #allocation7 [shape = 's32[1]{0}', space=sflag, size = 0x4, scoped, tag = 'scoped memory for m1_forward.1']
    #allocation8 [shape = 'u8[512]{0}', space=vmem, size = 0x400, scoped, tag = 'input window, operand 4, single buffered']
    #allocation9 [shape = 'u8[512]{0}', space=vmem, size = 0x400, scoped, tag = 'input window, operand 5, single buffered']
    #allocation10 [shape = 's32[1]{0}', space=sflag, size = 0x4, scoped, tag = 'scoped memory for m1_forward.1']
    #allocation11 [shape = 'u8[512]{0}', space=vmem, size = 0x400, scoped, tag = 'input window, operand 7, single buffered']
    #allocation12 [shape = 'u8[512]{0}', space=vmem, size = 0x400, scoped, tag = 'input window, operand 8, single buffered']
    #allocation13 [shape = 's32[1]{0}', space=sflag, size = 0x4, scoped, tag = 'scoped memory for m1_forward.1']
    #allocation14 [shape = 'u8[512]{0}', space=vmem, size = 0x400, scoped, tag = 'input window, operand 9, single buffered']
    #allocation15 [shape = 'u8[98304]{0}', space=vmem, size = 0x18000, scoped, tag = 'input window, operand 10, single buffered']
    #allocation16 [shape = 's32[1]{0}', space=sflag, size = 0x4, scoped, tag = 'scoped memory for m1_forward.1']
    #allocation17 [shape = 'u8[512]{0}', space=vmem, size = 0x400, scoped, tag = 'input window, operand 11, single buffered']
    #allocation18 [shape = 'u8[512]{0}', space=vmem, size = 0x400, scoped, tag = 'input window, operand 13, single buffered']
    #allocation19 [shape = 's32[1]{0}', space=sflag, size = 0x4, scoped, tag = 'scoped memory for m1_forward.1']
    #allocation20 [shape = 'u8[32768]{0}', space=vmem, size = 0x8000, scoped, tag = 'input window, operand 14, single buffered']
    #allocation21 [shape = 'u8[512]{0}', space=vmem, size = 0x400, scoped, tag = 'input window, operand 15, single buffered']
    #allocation22 [shape = 's32[1]{0}', space=sflag, size = 0x4, scoped, tag = 'scoped memory for m1_forward.1']
    #allocation23 [shape = 'u8[65536]{0}', space=vmem, size = 0x10000, scoped, tag = 'input window, operand 16, single buffered']
    #allocation24 [shape = 'u8[1024]{0}', space=vmem, size = 0x400, scoped, tag = 'input window, operand 17, single buffered']
    #allocation25 [shape = 's32[1]{0}', space=sflag, size = 0x4, scoped, tag = 'scoped memory for m1_forward.1']
    #allocation26 [shape = 'u8[65536]{0}', space=vmem, size = 0x10000, scoped, tag = 'input window, operand 18, single buffered']
    #allocation27 [shape = 'u8[512]{0}', space=vmem, size = 0x400, scoped, tag = 'input window, operand 19, single buffered']
    #allocation28 [shape = 's32[1]{0}', space=sflag, size = 0x4, scoped, tag = 'scoped memory for m1_forward.1']
    %25 = vsyncpa [#allocation5], 0
    %26 = vsyncpa [#allocation7], 0
    %27 = vsyncpa [#allocation10], 0
    %28 = vsyncpa [#allocation13], 0
    %29 = vsyncpa [#allocation16], 0
    %30 = vsyncpa [#allocation19], 0
    %31 = vsyncpa [#allocation22], 0
    %32 = vsyncpa [#allocation25], 0
    %33 = vsyncpa [#allocation28], 0
    // Predicated region
    $region2: #{m1_forward.1} parent=1 // pred_check
      _
    $region3: #{m1_forward.1} parent=1 // pred_check_branch
      %35 = sbr.rel (0) target = $region5
    $region4: #{m1_forward.1} parent=1 // pred_region
      _
    $region5: #{m1_forward.1} parent=1 // pred_fallthru
      _
    // Predicated region
    $region6: #{m1_forward.1} parent=1 // pred_check
      _
    $region7: #{m1_forward.1} parent=1 // pred_check_branch
      %37 = sbr.rel (0) target = $region9
    $region8: #{m1_forward.1} parent=1 // pred_region
      _
    $region9: #{m1_forward.1} parent=1 // pred_fallthru
      _
    // Predicated region
    $region10: #{m1_forward.1} parent=1 // pred_check
      _
    $region11: #{m1_forward.1} parent=1 // pred_check_branch
      %39 = sbr.rel (0) target = $region13
    $region12: #{m1_forward.1} parent=1 // pred_region
      %s41 = ssub.s32 128, 128
      %42 = vsyncadd [#allocation5], %s41
      %s43 = sshll.u32 [#allocation4], 4
      %s44 = int_to_ptr.vmem [resolvable:$true] %s43
      %49 = dma.hbm_to_vmem [thread:$0]  %s2, 128, %s44, [#allocation5], 64, 64, 4
    $region13: #{m1_forward.1} parent=1 // pred_fallthru
      _
    // Predicated region
    $region14: #{m1_forward.1} parent=1 // pred_check
      _
    $region15: #{m1_forward.1} parent=1 // pred_check_branch
      %51 = sbr.rel (0) target = $region17
    $region16: #{m1_forward.1} parent=1 // pred_region
      %s53 = ssub.s32 16, 16
      %54 = vsyncadd [#allocation7], %s53
      %s56 = sshll.u32 [#allocation6], 4
      %s57 = int_to_ptr.vmem [resolvable:$true] %s56
      %59 = dma.hbm_to_vmem [thread:$0]  %s3, 16, %s57, [#allocation7]
    $region17: #{m1_forward.1} parent=1 // pred_fallthru
      _
    // Predicated region
    $region18: #{m1_forward.1} parent=1 // pred_check
      _
    $region19: #{m1_forward.1} parent=1 // pred_check_branch
      %61 = sbr.rel (0) target = $region21
    $region20: #{m1_forward.1} parent=1 // pred_region
      %s63 = ssub.s32 16, 16
      %64 = vsyncadd [#allocation7], %s63
      %s66 = sshll.u32 [#allocation8], 4
      %s67 = int_to_ptr.vmem [resolvable:$true] %s66
      %69 = dma.hbm_to_vmem [thread:$0]  %s4, 16, %s67, [#allocation7]
    $region21: #{m1_forward.1} parent=1 // pred_fallthru
      _
    // Predicated region
    $region22: #{m1_forward.1} parent=1 // pred_check
      _
    $region23: #{m1_forward.1} parent=1 // pred_check_branch
      %71 = sbr.rel (0) target = $region25
    $region24: #{m1_forward.1} parent=1 // pred_region
      %s73 = ssub.s32 16, 16
      %74 = vsyncadd [#allocation10], %s73
      %s76 = sshll.u32 [#allocation9], 4
      %s77 = int_to_ptr.vmem [resolvable:$true] %s76
      %79 = dma.hbm_to_vmem [thread:$0]  %s5, 16, %s77, [#allocation10]
    $region25: #{m1_forward.1} parent=1 // pred_fallthru
      _
    // Predicated region
    $region26: #{m1_forward.1} parent=1 // pred_check
      _
    $region27: #{m1_forward.1} parent=1 // pred_check_branch
      %81 = sbr.rel (0) target = $region29
    $region28: #{m1_forward.1} parent=1 // pred_region
      _
    $region29: #{m1_forward.1} parent=1 // pred_fallthru
      _
    // Predicated region
    $region30: #{m1_forward.1} parent=1 // pred_check
      _
    $region31: #{m1_forward.1} parent=1 // pred_check_branch
      %83 = sbr.rel (0) target = $region33
    $region32: #{m1_forward.1} parent=1 // pred_region
      %s85 = ssub.s32 16, 16
      %86 = vsyncadd [#allocation10], %s85
      %s88 = sshll.u32 [#allocation11], 4
      %s89 = int_to_ptr.vmem [resolvable:$true] %s88
      %91 = dma.hbm_to_vmem [thread:$0]  %s7, 16, %s89, [#allocation10]
    $region33: #{m1_forward.1} parent=1 // pred_fallthru
      _
    // Predicated region
    $region34: #{m1_forward.1} parent=1 // pred_check
      _
    $region35: #{m1_forward.1} parent=1 // pred_check_branch
      %93 = sbr.rel (0) target = $region37
    $region36: #{m1_forward.1} parent=1 // pred_region
      %s95 = ssub.s32 16, 16
      %96 = vsyncadd [#allocation13], %s95
      %s98 = sshll.u32 [#allocation12], 4
      %s99 = int_to_ptr.vmem [resolvable:$true] %s98
      %101 = dma.hbm_to_vmem [thread:$0]  %s8, 16, %s99, [#allocation13]
    $region37: #{m1_forward.1} parent=1 // pred_fallthru
      _
    // Predicated region
    $region38: #{m1_forward.1} parent=1 // pred_check
      _
    $region39: #{m1_forward.1} parent=1 // pred_check_branch
      %103 = sbr.rel (0) target = $region41
    $region40: #{m1_forward.1} parent=1 // pred_region
      %s105 = ssub.s32 16, 16
      %106 = vsyncadd [#allocation13], %s105
      %s108 = sshll.u32 [#allocation14], 4
      %s109 = int_to_ptr.vmem [resolvable:$true] %s108
      %111 = dma.hbm_to_vmem [thread:$0]  %s9, 16, %s109, [#allocation13]
    $region41: #{m1_forward.1} parent=1 // pred_fallthru
      _
    // Predicated region
    $region42: #{m1_forward.1} parent=1 // pred_check
      _
    $region43: #{m1_forward.1} parent=1 // pred_check_branch
      %113 = sbr.rel (0) target = $region45
    $region44: #{m1_forward.1} parent=1 // pred_region
      %s115 = ssub.s32 3072, 3072
      %116 = vsyncadd [#allocation16], %s115
      %s117 = sshll.u32 [#allocation15], 4
      %s118 = int_to_ptr.vmem [resolvable:$true] %s117
      %123 = dma.hbm_to_vmem [thread:$0]  %s10, 3072, %s118, [#allocation16], 64, 64, 4
    $region45: #{m1_forward.1} parent=1 // pred_fallthru
      _
    // Predicated region
    $region46: #{m1_forward.1} parent=1 // pred_check
      _
    $region47: #{m1_forward.1} parent=1 // pred_check_branch
      %125 = sbr.rel (0) target = $region49
    $region48: #{m1_forward.1} parent=1 // pred_region
      %s127 = ssub.s32 16, 16
      %128 = vsyncadd [#allocation16], %s127
      %s130 = sshll.u32 [#allocation17], 4
      %s131 = int_to_ptr.vmem [resolvable:$true] %s130
      %133 = dma.hbm_to_vmem [thread:$0]  %s11, 16, %s131, [#allocation16]
    $region49: #{m1_forward.1} parent=1 // pred_fallthru
      _
    // Predicated region
    $region50: #{m1_forward.1} parent=1 // pred_check
      _
    $region51: #{m1_forward.1} parent=1 // pred_check_branch
      %135 = sbr.rel (0) target = $region53
    $region52: #{m1_forward.1} parent=1 // pred_region
      _
    $region53: #{m1_forward.1} parent=1 // pred_fallthru
      _
    // Predicated region
    $region54: #{m1_forward.1} parent=1 // pred_check
      _
    $region55: #{m1_forward.1} parent=1 // pred_check_branch
      %137 = sbr.rel (0) target = $region57
    $region56: #{m1_forward.1} parent=1 // pred_region
      %s139 = ssub.s32 16, 16
      %140 = vsyncadd [#allocation19], %s139
      %s142 = sshll.u32 [#allocation18], 4
      %s143 = int_to_ptr.vmem [resolvable:$true] %s142
      %145 = dma.hbm_to_vmem [thread:$0]  %s13, 16, %s143, [#allocation19]
    $region57: #{m1_forward.1} parent=1 // pred_fallthru
      _
    // Predicated region
    $region58: #{m1_forward.1} parent=1 // pred_check
      _
    $region59: #{m1_forward.1} parent=1 // pred_check_branch
      %147 = sbr.rel (0) target = $region61
    $region60: #{m1_forward.1} parent=1 // pred_region
      %s149 = ssub.s32 1024, 1024
      %150 = vsyncadd [#allocation19], %s149
      %s151 = sshll.u32 [#allocation20], 4
      %s152 = int_to_ptr.vmem [resolvable:$true] %s151
      %157 = dma.hbm_to_vmem [thread:$0]  %s14, 1024, %s152, [#allocation19], 64, 64, 4
    $region61: #{m1_forward.1} parent=1 // pred_fallthru
      _
    // Predicated region
    $region62: #{m1_forward.1} parent=1 // pred_check
      _
    $region63: #{m1_forward.1} parent=1 // pred_check_branch
      %159 = sbr.rel (0) target = $region65
    $region64: #{m1_forward.1} parent=1 // pred_region
      %s161 = ssub.s32 16, 16
      %162 = vsyncadd [#allocation22], %s161
      %s164 = sshll.u32 [#allocation21], 4
      %s165 = int_to_ptr.vmem [resolvable:$true] %s164
      %167 = dma.hbm_to_vmem [thread:$0]  %s15, 16, %s165, [#allocation22]
    $region65: #{m1_forward.1} parent=1 // pred_fallthru
      _
    // Predicated region
    $region66: #{m1_forward.1} parent=1 // pred_check
      _
    $region67: #{m1_forward.1} parent=1 // pred_check_branch
      %169 = sbr.rel (0) target = $region69
    $region68: #{m1_forward.1} parent=1 // pred_region
      %s171 = ssub.s32 2048, 2048
      %172 = vsyncadd [#allocation22], %s171
      %s173 = sshll.u32 [#allocation23], 4
      %s174 = int_to_ptr.vmem [resolvable:$true] %s173
      %179 = dma.hbm_to_vmem [thread:$0]  %s16, 2048, %s174, [#allocation22], 128, 128, 8
    $region69: #{m1_forward.1} parent=1 // pred_fallthru
      _
    // Predicated region
    $region70: #{m1_forward.1} parent=1 // pred_check
      _
    $region71: #{m1_forward.1} parent=1 // pred_check_branch
      %181 = sbr.rel (0) target = $region73
    $region72: #{m1_forward.1} parent=1 // pred_region
      %s183 = ssub.s32 32, 32
      %184 = vsyncadd [#allocation25], %s183
      %s186 = sshll.u32 [#allocation24], 4
      %s187 = int_to_ptr.vmem [resolvable:$true] %s186
      %189 = dma.hbm_to_vmem [thread:$0]  %s17, 32, %s187, [#allocation25]
    $region73: #{m1_forward.1} parent=1 // pred_fallthru
      _
    // Predicated region
    $region74: #{m1_forward.1} parent=1 // pred_check
      _
    $region75: #{m1_forward.1} parent=1 // pred_check_branch
      %191 = sbr.rel (0) target = $region77
    $region76: #{m1_forward.1} parent=1 // pred_region
      %s193 = ssub.s32 2048, 2048
      %194 = vsyncadd [#allocation25], %s193
      %s195 = sshll.u32 [#allocation26], 4
      %s196 = int_to_ptr.vmem [resolvable:$true] %s195
      %201 = dma.hbm_to_vmem [thread:$0]  %s18, 2048, %s196, [#allocation25], 64, 64, 4
    $region77: #{m1_forward.1} parent=1 // pred_fallthru
      _
    // Predicated region
    $region78: #{m1_forward.1} parent=1 // pred_check
      _
    $region79: #{m1_forward.1} parent=1 // pred_check_branch
      %203 = sbr.rel (0) target = $region81
    $region80: #{m1_forward.1} parent=1 // pred_region
      %s205 = ssub.s32 16, 16
      %206 = vsyncadd [#allocation28], %s205
      %s208 = sshll.u32 [#allocation27], 4
      %s209 = int_to_ptr.vmem [resolvable:$true] %s208
      %211 = dma.hbm_to_vmem [thread:$0]  %s19, 16, %s209, [#allocation28]
    $region81: #{m1_forward.1} parent=1 // pred_fallthru
      _
    // Predicated region
    $region82: #{m1_forward.1} parent=1 // pred_check
      _
    $region83: #{m1_forward.1} parent=1 // pred_check_branch
      %213 = sbr.rel (0) target = $region85
    $region84: #{m1_forward.1} parent=1 // pred_region
      %214 = dma.done [#allocation5], 128
    $region85: #{m1_forward.1} parent=1 // pred_fallthru
      _
    // Predicated region
    $region86: #{m1_forward.1} parent=1 // pred_check
      _
    $region87: #{m1_forward.1} parent=1 // pred_check_branch
      %216 = sbr.rel (0) target = $region89
    $region88: #{m1_forward.1} parent=1 // pred_region
      %217 = dma.done [#allocation7], 16
    $region89: #{m1_forward.1} parent=1 // pred_fallthru
      _
    // Predicated region
    $region90: #{m1_forward.1} parent=1 // pred_check
      _
    $region91: #{m1_forward.1} parent=1 // pred_check_branch
      %219 = sbr.rel (0) target = $region93
    $region92: #{m1_forward.1} parent=1 // pred_region
      %220 = dma.done [#allocation7], 16
    $region93: #{m1_forward.1} parent=1 // pred_fallthru
      _
    // Predicated region
    $region94: #{m1_forward.1} parent=1 // pred_check
      _
    $region95: #{m1_forward.1} parent=1 // pred_check_branch
      %222 = sbr.rel (0) target = $region97
    $region96: #{m1_forward.1} parent=1 // pred_region
      %223 = dma.done [#allocation10], 16
    $region97: #{m1_forward.1} parent=1 // pred_fallthru
      _
    // Predicated region
    $region98: #{m1_forward.1} parent=1 // pred_check
      _
    $region99: #{m1_forward.1} parent=1 // pred_check_branch
      %225 = sbr.rel (0) target = $region101
    $region100: #{m1_forward.1} parent=1 // pred_region
      %226 = dma.done [#allocation10], 16
    $region101: #{m1_forward.1} parent=1 // pred_fallthru
      _
    // Predicated region
    $region102: #{m1_forward.1} parent=1 // pred_check
      _
    $region103: #{m1_forward.1} parent=1 // pred_check_branch
      %228 = sbr.rel (0) target = $region105
    $region104: #{m1_forward.1} parent=1 // pred_region
      %229 = dma.done [#allocation13], 16
    $region105: #{m1_forward.1} parent=1 // pred_fallthru
      _
    // Predicated region
    $region106: #{m1_forward.1} parent=1 // pred_check
      _
    $region107: #{m1_forward.1} parent=1 // pred_check_branch
      %231 = sbr.rel (0) target = $region109
    $region108: #{m1_forward.1} parent=1 // pred_region
      %232 = dma.done [#allocation13], 16
    $region109: #{m1_forward.1} parent=1 // pred_fallthru
      _
    // Predicated region
    $region110: #{m1_forward.1} parent=1 // pred_check
      _
    $region111: #{m1_forward.1} parent=1 // pred_check_branch
      %234 = sbr.rel (0) target = $region113
    $region112: #{m1_forward.1} parent=1 // pred_region
      %235 = dma.done [#allocation16], 3072
    $region113: #{m1_forward.1} parent=1 // pred_fallthru
      _
    // Predicated region
    $region114: #{m1_forward.1} parent=1 // pred_check
      _
    $region115: #{m1_forward.1} parent=1 // pred_check_branch
      %237 = sbr.rel (0) target = $region117
    $region116: #{m1_forward.1} parent=1 // pred_region
      %238 = dma.done [#allocation16], 16
    $region117: #{m1_forward.1} parent=1 // pred_fallthru
      _
    // Predicated region
    $region118: #{m1_forward.1} parent=1 // pred_check
      _
    $region119: #{m1_forward.1} parent=1 // pred_check_branch
      %240 = sbr.rel (0) target = $region121
    $region120: #{m1_forward.1} parent=1 // pred_region
      %241 = dma.done [#allocation19], 16
    $region121: #{m1_forward.1} parent=1 // pred_fallthru
      _
    // Predicated region
    $region122: #{m1_forward.1} parent=1 // pred_check
      _
    $region123: #{m1_forward.1} parent=1 // pred_check_branch
      %243 = sbr.rel (0) target = $region125
    $region124: #{m1_forward.1} parent=1 // pred_region
      %244 = dma.done [#allocation19], 1024
    $region125: #{m1_forward.1} parent=1 // pred_fallthru
      _
    // Predicated region
    $region126: #{m1_forward.1} parent=1 // pred_check
      _
    $region127: #{m1_forward.1} parent=1 // pred_check_branch
      %246 = sbr.rel (0) target = $region129
    $region128: #{m1_forward.1} parent=1 // pred_region
      %247 = dma.done [#allocation22], 16
    $region129: #{m1_forward.1} parent=1 // pred_fallthru
      _
    // Predicated region
    $region130: #{m1_forward.1} parent=1 // pred_check
      _
    $region131: #{m1_forward.1} parent=1 // pred_check_branch
      %249 = sbr.rel (0) target = $region133
    $region132: #{m1_forward.1} parent=1 // pred_region
      %250 = dma.done [#allocation22], 2048
    $region133: #{m1_forward.1} parent=1 // pred_fallthru
      _
    // Predicated region
    $region134: #{m1_forward.1} parent=1 // pred_check
      _
    $region135: #{m1_forward.1} parent=1 // pred_check_branch
      %252 = sbr.rel (0) target = $region137
    $region136: #{m1_forward.1} parent=1 // pred_region
      %253 = dma.done [#allocation25], 32
    $region137: #{m1_forward.1} parent=1 // pred_fallthru
      _
    // Predicated region
    $region138: #{m1_forward.1} parent=1 // pred_check
      _
    $region139: #{m1_forward.1} parent=1 // pred_check_branch
      %255 = sbr.rel (0) target = $region141
    $region140: #{m1_forward.1} parent=1 // pred_region
      %256 = dma.done [#allocation25], 2048
    $region141: #{m1_forward.1} parent=1 // pred_fallthru
      _
    // Predicated region
    $region142: #{m1_forward.1} parent=1 // pred_check
      _
    $region143: #{m1_forward.1} parent=1 // pred_check_branch
      %258 = sbr.rel (0) target = $region145
    $region144: #{m1_forward.1} parent=1 // pred_region
      %259 = dma.done [#allocation28], 16
    $region145: #{m1_forward.1} parent=1 // pred_fallthru
      _
    %v261 = vld [vmem:[%s0] sm:$0xf]
    %v262 = vld [vmem:[%s0 + $0x4] sm:$0xf]
    %v263 = vld [vmem:[%s0 + $0x8] sm:$0xf]
    %v264 = vld [vmem:[%s0 + $0xc] sm:$0xf]
    %v265 = vld [vmem:[%s0 + $0x10] sm:$0xf]
    %v266 = vld [vmem:[%s0 + $0x14] sm:$0xf]
    %v267 = vld [vmem:[%s0 + $0x18] sm:$0xf]
    %v268 = vld [vmem:[%s0 + $0x1c] sm:$0xf]
    %v269 = vld [vmem:[%s0 + $0x20] sm:$0xf]
    %v270 = vld [vmem:[%s0 + $0x24] sm:$0xf]
    %v271 = vld [vmem:[%s0 + $0x28] sm:$0xf]
    %v272 = vld [vmem:[%s0 + $0x2c] sm:$0xf]
    %v273 = vld [vmem:[%s0 + $0x30] sm:$0xf]
    %v274 = vld [vmem:[%s0 + $0x34] sm:$0xf]
    %v275 = vld [vmem:[%s0 + $0x38] sm:$0xf]
    %v276 = vld [vmem:[%s0 + $0x3c] sm:$0xf]
    %v277 = vld [vmem:[#allocation4] sm:$0xf]
    %v278 = vld [vmem:[#allocation4 + $0x4] sm:$0xf]
    %v279 = vld [vmem:[#allocation6] sm:$0x1]
    %v281 = vlaneseq
    %v282 = vshrl.u32 %v281, 7
    %v283 = vsub.s32 0, %v282
    %v284 = vrot.slane %v279, %v283
    %v302 = vunpack.c.l.b16 %v261
    %v303 = vunpack.c.l.b16 %v262
    %v304 = vunpack.c.l.b16 %v263
    %v305 = vunpack.c.l.b16 %v264
    %v306 = vunpack.c.l.b16 %v265
    %v307 = vunpack.c.l.b16 %v266
    %v308 = vunpack.c.l.b16 %v267
    %v309 = vunpack.c.l.b16 %v268
    %v310 = vunpack.c.l.b16 %v269
    %v311 = vunpack.c.l.b16 %v270
    %v312 = vunpack.c.l.b16 %v271
    %v313 = vunpack.c.l.b16 %v272
    %v314 = vunpack.c.l.b16 %v273
    %v315 = vunpack.c.l.b16 %v274
    %v316 = vunpack.c.l.b16 %v275
    %v317 = vunpack.c.l.b16 %v276
    %v318 = vpack.c.b16 %v303, %v302
    %v319 = vpack.c.b16 %v305, %v304
    %v320 = vpack.c.b16 %v307, %v306
    %v321 = vpack.c.b16 %v309, %v308
    %v322 = vpack.c.b16 %v311, %v310
    %v323 = vpack.c.b16 %v313, %v312
    %v324 = vpack.c.b16 %v315, %v314
    %v325 = vpack.c.b16 %v317, %v316
    %v328 = vunpack.c.l.b16 %v277
    %v329 = vunpack.c.l.b16 %v278
    %v330 = vpack.c.b16 %v329, %v328
    %vm332 = vcmask 130048
    %v334 = vsel %vm332, %v318, 0
    %v337 = vsel %vm332, %v319, 0
    %v340 = vsel %vm332, %v320, 0
    %v343 = vsel %vm332, %v321, 0
    %v346 = vsel %vm332, %v322, 0
    %v349 = vsel %vm332, %v323, 0
    %v352 = vsel %vm332, %v324, 0
    %v355 = vsel %vm332, %v325, 0
    %357 = vmatprep.subr.bf16.mxu0 0
    %358 = vmatpush1.bf16.msra.mxu0 0
    %359 = vmatprep.subr.bf16.mxu0 0
    %360 = vmatpush1.bf16.msra.mxu0 0
    %361 = vmatprep.subr.bf16.mxu0 0
    %362 = vmatpush1.bf16.msra.mxu0 0
    %363 = vmatprep.subr.bf16.mxu0 0
    %364 = vmatpush1.bf16.msra.mxu0 0
    %365 = vmatprep.subr.bf16.mxu0 0
    %366 = vmatpush1.bf16.msra.mxu0 0
    %367 = vmatprep.subr.bf16.mxu0 0
    %368 = vmatpush1.bf16.msra.mxu0 0
    %369 = vmatprep.subr.bf16.mxu0 0
    %370 = vmatpush1.bf16.msra.mxu0 0
    %371 = vmatprep.subr.bf16.mxu0 0
    %372 = vmatpush1.bf16.msra.mxu0 %v330
    %373 = vmatprep.subr.bf16.mxu0 0
    %374 = vmatpush2.bf16.msra.mxu0 0
    %375 = vmatprep.subr.bf16.mxu0 0
    %376 = vmatpush2.bf16.msra.mxu0 0
    %377 = vmatprep.subr.bf16.mxu0 0
    %378 = vmatpush2.bf16.msra.mxu0 0
    %379 = vmatprep.subr.bf16.mxu0 0
    %380 = vmatpush2.bf16.msra.mxu0 0
    %381 = vmatprep.subr.bf16.mxu0 0
    %382 = vmatpush2.bf16.msra.mxu0 0
    %383 = vmatprep.subr.bf16.mxu0 0
    %384 = vmatpush2.bf16.msra.mxu0 0
    %385 = vmatprep.subr.bf16.mxu0 0
    %386 = vmatpush2.bf16.msra.mxu0 0
    %387 = vmatprep.subr.bf16.mxu0 0
    %388 = vmatpush2.bf16.msra.mxu0 0
    %389 = vmatprep.mubr.bf16.mxu0 0
    %390 = vmatmul.mubr.bf16.gmra.mxu0 %v334
    %v391 = vpop.f32.mrf.mxu0
    %v392 = vadd.f32 %v284, %v391
    %v393 = vpop.f32.mrf.mxu0
    %v394 = vpop.f32.mrf.mxu0
    %v395 = vadd.f32 %v284, %v394
    %v396 = vpop.f32.mrf.mxu0
    %397 = vmatprep.mubr.bf16.mxu0 0
    %398 = vmatmul.mubr.bf16.gmra.mxu0 %v337
    %v399 = vpop.f32.mrf.mxu0
    %v400 = vadd.f32 %v284, %v399
    %v401 = vpop.f32.mrf.mxu0
    %v402 = vpop.f32.mrf.mxu0
    %v403 = vadd.f32 %v284, %v402
    %v404 = vpop.f32.mrf.mxu0
    %405 = vmatprep.mubr.bf16.mxu0 0
    %406 = vmatmul.mubr.bf16.gmra.mxu0 %v340
    %v407 = vpop.f32.mrf.mxu0
    %v408 = vadd.f32 %v284, %v407
    %v409 = vpop.f32.mrf.mxu0
    %v410 = vpop.f32.mrf.mxu0
    %v411 = vadd.f32 %v284, %v410
    %v412 = vpop.f32.mrf.mxu0
    %413 = vmatprep.mubr.bf16.mxu0 0
    %414 = vmatmul.mubr.bf16.gmra.mxu0 %v343
    %v415 = vpop.f32.mrf.mxu0
    %v416 = vadd.f32 %v284, %v415
    %v417 = vpop.f32.mrf.mxu0
    %v418 = vpop.f32.mrf.mxu0
    %v419 = vadd.f32 %v284, %v418
    %v420 = vpop.f32.mrf.mxu0
    %421 = vmatprep.mubr.bf16.mxu0 0
    %422 = vmatmul.mubr.bf16.gmra.mxu0 %v346
    %v423 = vpop.f32.mrf.mxu0
    %v424 = vadd.f32 %v284, %v423
    %v425 = vpop.f32.mrf.mxu0
    %v426 = vpop.f32.mrf.mxu0
    %v427 = vadd.f32 %v284, %v426
    %v428 = vpop.f32.mrf.mxu0
    %429 = vmatprep.mubr.bf16.mxu0 0
    %430 = vmatmul.mubr.bf16.gmra.mxu0 %v349
    %v431 = vpop.f32.mrf.mxu0
    %v432 = vadd.f32 %v284, %v431
    %v433 = vpop.f32.mrf.mxu0
    %v434 = vpop.f32.mrf.mxu0
    %v435 = vadd.f32 %v284, %v434
    %v436 = vpop.f32.mrf.mxu0
    %437 = vmatprep.mubr.bf16.mxu0 0
    %438 = vmatmul.mubr.bf16.gmra.mxu0 %v352
    %v439 = vpop.f32.mrf.mxu0
    %v440 = vadd.f32 %v284, %v439
    %v441 = vpop.f32.mrf.mxu0
    %v442 = vpop.f32.mrf.mxu0
    %v443 = vadd.f32 %v284, %v442
    %v444 = vpop.f32.mrf.mxu0
    %445 = vmatprep.mubr.bf16.mxu0 0
    %446 = vmatmul.mubr.bf16.gmra.mxu0 %v355
    %v447 = vpop.f32.mrf.mxu0
    %v448 = vadd.f32 %v284, %v447
    %v449 = vpop.f32.mrf.mxu0
    %v450 = vpop.f32.mrf.mxu0
    %v451 = vadd.f32 %v284, %v450
    %v452 = vpop.f32.mrf.mxu0
    %453 = vdwg.mxu0
    %v454 = vld [vmem:[#allocation8] sm:$0x1]
    %v455 = vld [vmem:[#allocation9] sm:$0x1]
    %v456 = vadd.f32 %v392, %v395
    %v457 = vadd.f32 %v456, %v400
    %v458 = vadd.f32 %v457, %v403
    %v459 = vadd.f32 %v458, %v408
    %v460 = vadd.f32 %v459, %v411
    %v461 = vadd.f32 %v460, %v416
    %v462 = vadd.f32 %v461, %v419
    %v463 = vadd.f32 %v462, %v424
    %v464 = vadd.f32 %v463, %v427
    %v465 = vadd.f32 %v464, %v432
    %v466 = vadd.f32 %v465, %v435
    %v467 = vadd.f32 %v466, %v440
    %v468 = vadd.f32 %v467, %v443
    %v469 = vadd.f32 %v468, %v448
    %v470 = vadd.f32 %v469, %v451
    %v471 = vrot.slane %v470, 4
    %v472 = vadd.f32 %v470, %v471
    %v473 = vrot.slane %v472, 2
    %v474 = vadd.f32 %v472, %v473
    %v475 = vrot.slane %v474, 1
    %v476 = vadd.f32 %v474, %v475
    %v477 = vmul.f32 %v476, 0.0078125
    %v478 = vsub.f32 %v392, %v477
    %v479 = vsub.f32 %v395, %v477
    %v480 = vsub.f32 %v400, %v477
    %v481 = vsub.f32 %v403, %v477
    %v482 = vsub.f32 %v408, %v477
    %v483 = vsub.f32 %v411, %v477
    %v484 = vsub.f32 %v416, %v477
    %v485 = vsub.f32 %v419, %v477
    %v486 = vsub.f32 %v424, %v477
    %v487 = vsub.f32 %v427, %v477
    %v488 = vsub.f32 %v432, %v477
    %v489 = vsub.f32 %v435, %v477
    %v490 = vsub.f32 %v440, %v477
    %v491 = vsub.f32 %v443, %v477
    %v492 = vsub.f32 %v448, %v477
    %v493 = vsub.f32 %v451, %v477
    %v494 = vmul.f32 %v478, %v478
    %v495 = vmul.f32 %v479, %v479
    %v496 = vmul.f32 %v480, %v480
    %v497 = vmul.f32 %v481, %v481
    %v498 = vmul.f32 %v482, %v482
    %v499 = vmul.f32 %v483, %v483
    %v500 = vmul.f32 %v484, %v484
    %v501 = vmul.f32 %v485, %v485
    %v502 = vmul.f32 %v486, %v486
    %v503 = vmul.f32 %v487, %v487
    %v504 = vmul.f32 %v488, %v488
    %v505 = vmul.f32 %v489, %v489
    %v506 = vmul.f32 %v490, %v490
    %v507 = vmul.f32 %v491, %v491
    %v508 = vmul.f32 %v492, %v492
    %v509 = vmul.f32 %v493, %v493
    %v510 = vadd.f32 %v494, %v495
    %v511 = vadd.f32 %v510, %v496
    %v512 = vadd.f32 %v511, %v497
    %v513 = vadd.f32 %v512, %v498
    %v514 = vadd.f32 %v513, %v499
    %v515 = vadd.f32 %v514, %v500
    %v516 = vadd.f32 %v515, %v501
    %v517 = vadd.f32 %v516, %v502
    %v518 = vadd.f32 %v517, %v503
    %v519 = vadd.f32 %v518, %v504
    %v520 = vadd.f32 %v519, %v505
    %v521 = vadd.f32 %v520, %v506
    %v522 = vadd.f32 %v521, %v507
    %v523 = vadd.f32 %v522, %v508
    %v524 = vadd.f32 %v523, %v509
    %v525 = vrot.slane %v524, 4
    %v526 = vadd.f32 %v524, %v525
    %v527 = vrot.slane %v526, 2
    %v528 = vadd.f32 %v526, %v527
    %v529 = vrot.slane %v528, 1
    %v530 = vadd.f32 %v528, %v529
    %v531 = vmul.f32 %v530, 0.0078125
    %v532 = vadd.f32 %v531, 1e-05
    %v533 = vrsqrt.pop %v532
    %v534 = vmul.f32 %v454, %v533
    %v535 = vmul.f32 %v477, %v534
    %v536 = vsub.f32 %v455, %v535
    %v538 = vlaneseq
    %v539 = vshrl.u32 %v538, 7
    %v540 = vsub.s32 0, %v539
    %v541 = vrot.slane %v534, %v540
    %v543 = vmul.f32 %v392, %v541
    %v544 = vmul.f32 %v395, %v541
    %v545 = vmul.f32 %v400, %v541
    %v546 = vmul.f32 %v403, %v541
    %v547 = vmul.f32 %v408, %v541
    %v548 = vmul.f32 %v411, %v541
    %v549 = vmul.f32 %v416, %v541
    %v550 = vmul.f32 %v419, %v541
    %v551 = vmul.f32 %v424, %v541
    %v552 = vmul.f32 %v427, %v541
    %v553 = vmul.f32 %v432, %v541
    %v554 = vmul.f32 %v435, %v541
    %v555 = vmul.f32 %v440, %v541
    %v556 = vmul.f32 %v443, %v541
    %v557 = vmul.f32 %v448, %v541
    %v558 = vmul.f32 %v451, %v541
    %v560 = vlaneseq
    %v561 = vshrl.u32 %v560, 7
    %v562 = vsub.s32 0, %v561
    %v563 = vrot.slane %v536, %v562
    %v565 = vadd.f32 %v543, %v563
    %v566 = vadd.f32 %v544, %v563
    %v567 = vadd.f32 %v545, %v563
    %v568 = vadd.f32 %v546, %v563
    %v569 = vadd.f32 %v547, %v563
    %v570 = vadd.f32 %v548, %v563
    %v571 = vadd.f32 %v549, %v563
    %v572 = vadd.f32 %v550, %v563
    %v573 = vadd.f32 %v551, %v563
    %v574 = vadd.f32 %v552, %v563
    %v575 = vadd.f32 %v553, %v563
    %v576 = vadd.f32 %v554, %v563
    %v577 = vadd.f32 %v555, %v563
    %v578 = vadd.f32 %v556, %v563
    %v579 = vadd.f32 %v557, %v563
    %v580 = vadd.f32 %v558, %v563
    %v581 = vmax.f32 %v565, 0.0
    %v582 = vmax.f32 %v566, 0.0
    %v583 = vmax.f32 %v567, 0.0
    %v584 = vmax.f32 %v568, 0.0
    %v585 = vmax.f32 %v569, 0.0
    %v586 = vmax.f32 %v570, 0.0
    %v587 = vmax.f32 %v571, 0.0
    %v588 = vmax.f32 %v572, 0.0
    %v589 = vmax.f32 %v573, 0.0
    %v590 = vmax.f32 %v574, 0.0
    %v591 = vmax.f32 %v575, 0.0
    %v592 = vmax.f32 %v576, 0.0
    %v593 = vmax.f32 %v577, 0.0
    %v594 = vmax.f32 %v578, 0.0
    %v595 = vmax.f32 %v579, 0.0
    %v596 = vmax.f32 %v580, 0.0
    %597 = vst [vmem:[#allocation2] sm:$0xff] %v581
    %598 = vst [vmem:[#allocation2 + $0x8] sm:$0xff] %v582
    %599 = vst [vmem:[#allocation2 + $0x10] sm:$0xff] %v583
    %600 = vst [vmem:[#allocation2 + $0x18] sm:$0xff] %v584
    %601 = vst [vmem:[#allocation2 + $0x20] sm:$0xff] %v585
    %602 = vst [vmem:[#allocation2 + $0x28] sm:$0xff] %v586
    %603 = vst [vmem:[#allocation2 + $0x30] sm:$0xff] %v587
    %604 = vst [vmem:[#allocation2 + $0x38] sm:$0xff] %v588
    %605 = vst [vmem:[#allocation2 + $0x40] sm:$0xff] %v589
    %606 = vst [vmem:[#allocation2 + $0x48] sm:$0xff] %v590
    %607 = vst [vmem:[#allocation2 + $0x50] sm:$0xff] %v591
    %608 = vst [vmem:[#allocation2 + $0x58] sm:$0xff] %v592
    %609 = vst [vmem:[#allocation2 + $0x60] sm:$0xff] %v593
    %610 = vst [vmem:[#allocation2 + $0x68] sm:$0xff] %v594
    %611 = vst [vmem:[#allocation2 + $0x70] sm:$0xff] %v595
    %612 = vst [vmem:[#allocation2 + $0x78] sm:$0xff] %v596
    %v613 = vld [vmem:[#allocation2] ss:$4 sm:$0xff]
    %s614 = scalar_lea.vmem [#allocation2], 32
    %v615 = vld [vmem:[%s614] ss:$4 sm:$0xff]
    %s616 = scalar_lea.vmem [#allocation2], 64
    %v617 = vld [vmem:[%s616] ss:$4 sm:$0xff]
    %s618 = scalar_lea.vmem [#allocation2], 96
    %v619 = vld [vmem:[%s618] ss:$4 sm:$0xff]
    %s620 = scalar_lea.vmem [#allocation2], 1
    %v621 = vld [vmem:[%s620] ss:$4 sm:$0xff]
    %s622 = scalar_lea.vmem [#allocation2], 33
    %v623 = vld [vmem:[%s622] ss:$4 sm:$0xff]
    %s624 = scalar_lea.vmem [#allocation2], 65
    %v625 = vld [vmem:[%s624] ss:$4 sm:$0xff]
    %s626 = scalar_lea.vmem [#allocation2], 97
    %v627 = vld [vmem:[%s626] ss:$4 sm:$0xff]
    %v628 = vmax.f32 %v613, %v621
    %v629 = vmax.f32 %v615, %v623
    %v630 = vmax.f32 %v617, %v625
    %v631 = vmax.f32 %v619, %v627
    %s632 = scalar_lea.vmem [#allocation2], 2
    %v633 = vld [vmem:[%s632] ss:$4 sm:$0xff]
    %s634 = scalar_lea.vmem [#allocation2], 34
    %v635 = vld [vmem:[%s634] ss:$4 sm:$0xff]
    %s636 = scalar_lea.vmem [#allocation2], 66
    %v637 = vld [vmem:[%s636] ss:$4 sm:$0xff]
    %s638 = scalar_lea.vmem [#allocation2], 98
    %v639 = vld [vmem:[%s638] ss:$4 sm:$0xff]
    %v640 = vmax.f32 %v628, %v633
    %v641 = vmax.f32 %v629, %v635
    %v642 = vmax.f32 %v630, %v637
    %v643 = vmax.f32 %v631, %v639
    %s644 = scalar_lea.vmem [#allocation2], 3
    %v645 = vld [vmem:[%s644] ss:$4 sm:$0xff]
    %s646 = scalar_lea.vmem [#allocation2], 35
    %v647 = vld [vmem:[%s646] ss:$4 sm:$0xff]
    %s648 = scalar_lea.vmem [#allocation2], 67
    %v649 = vld [vmem:[%s648] ss:$4 sm:$0xff]
    %s650 = scalar_lea.vmem [#allocation2], 99
    %v651 = vld [vmem:[%s650] ss:$4 sm:$0xff]
    %v652 = vmax.f32 %v640, %v645
    %v653 = vmax.f32 %v641, %v647
    %v654 = vmax.f32 %v642, %v649
    %v655 = vmax.f32 %v643, %v651
    %vm660 = vcmask 1046528
    %v661 = vrot.slane %v652, 1
    %v662 = vrot.slane %v653, 1
    %v663 = vsel %vm660, %v661, %v662
    %v664 = vrot.slane %v654, 1
    %v665 = vsel %vm660, %v662, %v664
    %v666 = vrot.slane %v655, 1
    %v667 = vsel %vm660, %v664, %v666
    %v672 = vsel %vm660, %v666, 0.0
    %vm673 = vcmask 1045504
    %v674 = vrot.slane %v652, 2
    %v675 = vrot.slane %v653, 2
    %v676 = vsel %vm673, %v674, %v675
    %v677 = vrot.slane %v654, 2
    %v678 = vsel %vm673, %v675, %v677
    %v679 = vrot.slane %v655, 2
    %v680 = vsel %vm673, %v677, %v679
    %v685 = vsel %vm673, %v679, 0.0
    %v686 = vpack.c.bf16 %v653, %v652
    %v687 = vpack.c.bf16 %v665, %v663
    %v688 = vpack.c.bf16 %v678, %v676
    %v689 = vpack.c.bf16 %v655, %v654
    %v690 = vpack.c.bf16 %v672, %v667
    %v691 = vpack.c.bf16 %v685, %v680
    %v692 = vld [vmem:[%s6] sm:$0xf]
    %v693 = vld [vmem:[%s6 + $0x4] sm:$0xf]
    %v694 = vld [vmem:[%s6 + $0x8] sm:$0xf]
    %v695 = vld [vmem:[%s6 + $0xc] sm:$0xf]
    %v696 = vld [vmem:[%s6 + $0x10] sm:$0xf]
    %v697 = vld [vmem:[%s6 + $0x14] sm:$0xf]
    %v698 = vld [vmem:[%s6 + $0x18] sm:$0xf]
    %v699 = vld [vmem:[%s6 + $0x1c] sm:$0xf]
    %v700 = vld [vmem:[%s6 + $0x20] sm:$0xf]
    %v701 = vld [vmem:[%s6 + $0x24] sm:$0xf]
    %v702 = vld [vmem:[%s6 + $0x28] sm:$0xf]
    %v703 = vld [vmem:[%s6 + $0x2c] sm:$0xf]
    %v704 = vld [vmem:[%s6 + $0x30] sm:$0xf]
    %v705 = vld [vmem:[%s6 + $0x34] sm:$0xf]
    %v706 = vld [vmem:[%s6 + $0x38] sm:$0xf]
    %v707 = vld [vmem:[%s6 + $0x3c] sm:$0xf]
    %v708 = vld [vmem:[%s6 + $0x40] sm:$0xf]
    %v709 = vld [vmem:[%s6 + $0x44] sm:$0xf]
    %v710 = vld [vmem:[%s6 + $0x48] sm:$0xf]
    %v711 = vld [vmem:[%s6 + $0x4c] sm:$0xf]
    %v712 = vld [vmem:[%s6 + $0x50] sm:$0xf]
    %v713 = vld [vmem:[%s6 + $0x54] sm:$0xf]
    %v714 = vld [vmem:[%s6 + $0x58] sm:$0xf]
    %v715 = vld [vmem:[%s6 + $0x5c] sm:$0xf]
    %v716 = vld [vmem:[%s6 + $0x60] sm:$0xf]
    %v717 = vld [vmem:[%s6 + $0x64] sm:$0xf]
    %v718 = vld [vmem:[%s6 + $0x68] sm:$0xf]
    %v719 = vld [vmem:[%s6 + $0x6c] sm:$0xf]
    %v720 = vld [vmem:[%s6 + $0x70] sm:$0xf]
    %v721 = vld [vmem:[%s6 + $0x74] sm:$0xf]
    %v722 = vld [vmem:[%s6 + $0x78] sm:$0xf]
    %v723 = vld [vmem:[%s6 + $0x7c] sm:$0xf]
    %v724 = vld [vmem:[%s6 + $0x80] sm:$0xf]
    %v725 = vld [vmem:[%s6 + $0x84] sm:$0xf]
    %v726 = vld [vmem:[%s6 + $0x88] sm:$0xf]
    %v727 = vld [vmem:[%s6 + $0x8c] sm:$0xf]
    %v728 = vld [vmem:[%s6 + $0x90] sm:$0xf]
    %v729 = vld [vmem:[%s6 + $0x94] sm:$0xf]
    %v730 = vld [vmem:[%s6 + $0x98] sm:$0xf]
    %v731 = vld [vmem:[%s6 + $0x9c] sm:$0xf]
    %v732 = vld [vmem:[%s6 + $0xa0] sm:$0xf]
    %v733 = vld [vmem:[%s6 + $0xa4] sm:$0xf]
    %v734 = vld [vmem:[%s6 + $0xa8] sm:$0xf]
    %v735 = vld [vmem:[%s6 + $0xac] sm:$0xf]
    %v736 = vld [vmem:[%s6 + $0xb0] sm:$0xf]
    %v737 = vld [vmem:[%s6 + $0xb4] sm:$0xf]
    %v738 = vld [vmem:[%s6 + $0xb8] sm:$0xf]
    %v739 = vld [vmem:[%s6 + $0xbc] sm:$0xf]
    %v740 = vld [vmem:[#allocation11] sm:$0x1]
    %v742 = vlaneseq
    %v743 = vshrl.u32 %v742, 7
    %v744 = vsub.s32 0, %v743
    %v745 = vrot.slane %v740, %v744
    %v795 = vunpack.c.l.b16 %v692
    %v796 = vunpack.c.l.b16 %v693
    %v797 = vunpack.c.l.b16 %v694
    %v798 = vunpack.c.l.b16 %v695
    %v799 = vunpack.c.l.b16 %v696
    %v800 = vunpack.c.l.b16 %v697
    %v801 = vunpack.c.l.b16 %v698
    %v802 = vunpack.c.l.b16 %v699
    %v803 = vunpack.c.l.b16 %v700
    %v804 = vunpack.c.l.b16 %v701
    %v805 = vunpack.c.l.b16 %v702
    %v806 = vunpack.c.l.b16 %v703
    %v807 = vunpack.c.l.b16 %v704
    %v808 = vunpack.c.l.b16 %v705
    %v809 = vunpack.c.l.b16 %v706
    %v810 = vunpack.c.l.b16 %v707
    %v811 = vunpack.c.l.b16 %v708
    %v812 = vunpack.c.l.b16 %v709
    %v813 = vunpack.c.l.b16 %v710
    %v814 = vunpack.c.l.b16 %v711
    %v815 = vunpack.c.l.b16 %v712
    %v816 = vunpack.c.l.b16 %v713
    %v817 = vunpack.c.l.b16 %v714
    %v818 = vunpack.c.l.b16 %v715
    %v819 = vunpack.c.l.b16 %v716
    %v820 = vunpack.c.l.b16 %v717
    %v821 = vunpack.c.l.b16 %v718
    %v822 = vunpack.c.l.b16 %v719
    %v823 = vunpack.c.l.b16 %v720
    %v824 = vunpack.c.l.b16 %v721
    %v825 = vunpack.c.l.b16 %v722
    %v826 = vunpack.c.l.b16 %v723
    %v827 = vunpack.c.l.b16 %v724
    %v828 = vunpack.c.l.b16 %v725
    %v829 = vunpack.c.l.b16 %v726
    %v830 = vunpack.c.l.b16 %v727
    %v831 = vunpack.c.l.b16 %v728
    %v832 = vunpack.c.l.b16 %v729
    %v833 = vunpack.c.l.b16 %v730
    %v834 = vunpack.c.l.b16 %v731
    %v835 = vunpack.c.l.b16 %v732
    %v836 = vunpack.c.l.b16 %v733
    %v837 = vunpack.c.l.b16 %v734
    %v838 = vunpack.c.l.b16 %v735
    %v839 = vunpack.c.l.b16 %v736
    %v840 = vunpack.c.l.b16 %v737
    %v841 = vunpack.c.l.b16 %v738
    %v842 = vunpack.c.l.b16 %v739
    %v843 = vpack.c.b16 %v796, %v795
    %v844 = vpack.c.b16 %v798, %v797
    %v845 = vpack.c.b16 %v800, %v799
    %v846 = vpack.c.b16 %v802, %v801
    %v847 = vpack.c.b16 %v804, %v803
    %v848 = vpack.c.b16 %v806, %v805
    %v849 = vpack.c.b16 %v808, %v807
    %v850 = vpack.c.b16 %v810, %v809
    %v851 = vpack.c.b16 %v812, %v811
    %v852 = vpack.c.b16 %v814, %v813
    %v853 = vpack.c.b16 %v816, %v815
    %v854 = vpack.c.b16 %v818, %v817
    %v855 = vpack.c.b16 %v820, %v819
    %v856 = vpack.c.b16 %v822, %v821
    %v857 = vpack.c.b16 %v824, %v823
    %v858 = vpack.c.b16 %v826, %v825
    %v859 = vpack.c.b16 %v828, %v827
    %v860 = vpack.c.b16 %v830, %v829
    %v861 = vpack.c.b16 %v832, %v831
    %v862 = vpack.c.b16 %v834, %v833
    %v863 = vpack.c.b16 %v836, %v835
    %v864 = vpack.c.b16 %v838, %v837
    %v865 = vpack.c.b16 %v840, %v839
    %v866 = vpack.c.b16 %v842, %v841
    %891 = vmatprep.subr.bf16.mxu0 0
    %892 = vmatpush1.bf16.msra.mxu0 %v850
    %893 = vmatprep.subr.bf16.mxu0 0
    %894 = vmatpush1.bf16.msra.mxu0 %v849
    %895 = vmatprep.subr.bf16.mxu0 0
    %896 = vmatpush1.bf16.msra.mxu0 %v848
    %897 = vmatprep.subr.bf16.mxu0 0
    %898 = vmatpush1.bf16.msra.mxu0 %v847
    %899 = vmatprep.subr.bf16.mxu0 0
    %900 = vmatpush1.bf16.msra.mxu0 %v846
    %901 = vmatprep.subr.bf16.mxu0 0
    %902 = vmatpush1.bf16.msra.mxu0 %v845
    %903 = vmatprep.subr.bf16.mxu0 0
    %904 = vmatpush1.bf16.msra.mxu0 %v844
    %905 = vmatprep.subr.bf16.mxu0 0
    %906 = vmatpush1.bf16.msra.mxu0 %v843
    %907 = vmatprep.subr.bf16.mxu0 0
    %908 = vmatpush2.bf16.msra.mxu0 %v858
    %909 = vmatprep.subr.bf16.mxu0 0
    %910 = vmatpush2.bf16.msra.mxu0 %v857
    %911 = vmatprep.subr.bf16.mxu0 0
    %912 = vmatpush2.bf16.msra.mxu0 %v856
    %913 = vmatprep.subr.bf16.mxu0 0
    %914 = vmatpush2.bf16.msra.mxu0 %v855
    %915 = vmatprep.subr.bf16.mxu0 0
    %916 = vmatpush2.bf16.msra.mxu0 %v854
    %917 = vmatprep.subr.bf16.mxu0 0
    %918 = vmatpush2.bf16.msra.mxu0 %v853
    %919 = vmatprep.subr.bf16.mxu0 0
    %920 = vmatpush2.bf16.msra.mxu0 %v852
    %921 = vmatprep.subr.bf16.mxu0 0
    %922 = vmatpush2.bf16.msra.mxu0 %v851
    %923 = vmatprep.mubr.bf16.mxu0 %v687
    %924 = vmatmul.mubr.bf16.gmra.mxu0 %v686
    %v925 = vpop.f32.mrf.mxu0
    %v926 = vadd.f32 %v745, %v925
    %v927 = vpop.f32.mrf.mxu0
    %v928 = vpop.f32.mrf.mxu0
    %v929 = vadd.f32 %v745, %v928
    %v930 = vpop.f32.mrf.mxu0
    %931 = vmatprep.mubr.bf16.mxu0 %v690
    %932 = vmatmul.mubr.bf16.gmra.mxu0 %v689
    %v933 = vpop.f32.mrf.mxu0
    %v934 = vadd.f32 %v745, %v933
    %v935 = vpop.f32.mrf.mxu0
    %v936 = vpop.f32.mrf.mxu0
    %v937 = vadd.f32 %v745, %v936
    %v938 = vpop.f32.mrf.mxu0
    %939 = vdwg.mxu0
    %940 = vmatprep.subr.bf16.mxu0 0
    %941 = vmatpush1.bf16.msra.mxu0 %v866
    %942 = vmatprep.subr.bf16.mxu0 0
    %943 = vmatpush1.bf16.msra.mxu0 %v865
    %944 = vmatprep.subr.bf16.mxu0 0
    %945 = vmatpush1.bf16.msra.mxu0 %v864
    %946 = vmatprep.subr.bf16.mxu0 0
    %947 = vmatpush1.bf16.msra.mxu0 %v863
    %948 = vmatprep.subr.bf16.mxu0 0
    %949 = vmatpush1.bf16.msra.mxu0 %v862
    %950 = vmatprep.subr.bf16.mxu0 0
    %951 = vmatpush1.bf16.msra.mxu0 %v861
    %952 = vmatprep.subr.bf16.mxu0 0
    %953 = vmatpush1.bf16.msra.mxu0 %v860
    %954 = vmatprep.subr.bf16.mxu0 0
    %955 = vmatpush1.bf16.msra.mxu0 %v859
    %956 = vmatprep.subr.bf16.mxu0 0
    %957 = vmatpush2.bf16.msra.mxu0 0
    %958 = vmatprep.subr.bf16.mxu0 0
    %959 = vmatpush2.bf16.msra.mxu0 0
    %960 = vmatprep.subr.bf16.mxu0 0
    %961 = vmatpush2.bf16.msra.mxu0 0
    %962 = vmatprep.subr.bf16.mxu0 0
    %963 = vmatpush2.bf16.msra.mxu0 0
    %964 = vmatprep.subr.bf16.mxu0 0
    %965 = vmatpush2.bf16.msra.mxu0 0
    %966 = vmatprep.subr.bf16.mxu0 0
    %967 = vmatpush2.bf16.msra.mxu0 0
    %968 = vmatprep.subr.bf16.mxu0 0
    %969 = vmatpush2.bf16.msra.mxu0 0
    %970 = vmatprep.subr.bf16.mxu0 0
    %971 = vmatpush2.bf16.msra.mxu0 0
    %972 = vmatprep.mubr.bf16.mxu0 0
    %973 = vmatmul.mubr.bf16.gmra.mxu0 %v688
    %v974 = vpop.f32.mrf.mxu0
    %v975 = vadd.f32 %v926, %v974
    %v976 = vpop.f32.mrf.mxu0
    %v977 = vpop.f32.mrf.mxu0
    %v978 = vadd.f32 %v929, %v977
    %v979 = vpop.f32.mrf.mxu0
    %980 = vmatprep.mubr.bf16.mxu0 0
    %981 = vmatmul.mubr.bf16.gmra.mxu0 %v691
    %v982 = vpop.f32.mrf.mxu0
    %v983 = vadd.f32 %v934, %v982
    %v984 = vpop.f32.mrf.mxu0
    %v985 = vpop.f32.mrf.mxu0
    %v986 = vadd.f32 %v937, %v985
    %v987 = vpop.f32.mrf.mxu0
    %988 = vdwg.mxu0
    %v989 = vld [vmem:[#allocation12] sm:$0x1]
    %v990 = vld [vmem:[#allocation14] sm:$0x1]
    %v991 = vld [vmem:[%s1] sm:$0xff]
    %v992 = vld [vmem:[%s1 + $0x8] sm:$0xff]
    %v993 = vld [vmem:[%s1 + $0x10] sm:$0xff]
    %v994 = vld [vmem:[%s1 + $0x18] sm:$0xff]
    %996 = vset.pattern.permute.xlu0 0
    %997 = vperm.xlu0 %996, %v991
    %v998 = vpop.permute.xlu0 %997
    %1001 = vset.pattern.permute.xlu0 0
    %1002 = vperm.xlu0 %1001, %v992
    %v1003 = vpop.permute.xlu0 %1002
    %1006 = vset.pattern.permute.xlu0 0
    %1007 = vperm.xlu0 %1006, %v993
    %v1008 = vpop.permute.xlu0 %1007
    %1011 = vset.pattern.permute.xlu0 0
    %1012 = vperm.xlu0 %1011, %v994
    %v1013 = vpop.permute.xlu0 %1012
    %v1015 = vmul.f32 %v975, %v998
    %v1016 = vmul.f32 %v978, %v1003
    %v1017 = vmul.f32 %v983, %v1008
    %v1018 = vmul.f32 %v986, %v1013
    %v1019 = vadd.f32 %v1015, %v1016
    %v1020 = vadd.f32 %v1019, %v1017
    %v1021 = vadd.f32 %v1020, %v1018
    %v1022 = vrot.slane %v1021, 4
    %v1023 = vadd.f32 %v1021, %v1022
    %v1024 = vrot.slane %v1023, 2
    %v1025 = vadd.f32 %v1023, %v1024
    %v1026 = vrot.slane %v1025, 1
    %v1027 = vadd.f32 %v1025, %v1026
    %v1028 = vmul.f32 %v1027, 0.035714287
    %v1029 = vsub.f32 %v975, %v1028
    %v1030 = vsub.f32 %v978, %v1028
    %v1031 = vsub.f32 %v983, %v1028
    %v1032 = vsub.f32 %v986, %v1028
    %v1033 = vmul.f32 %v1029, %v998
    %v1034 = vmul.f32 %v1030, %v1003
    %v1035 = vmul.f32 %v1031, %v1008
    %v1036 = vmul.f32 %v1032, %v1013
    %v1037 = vmul.f32 %v1033, %v1033
    %v1038 = vmul.f32 %v1034, %v1034
    %v1039 = vmul.f32 %v1035, %v1035
    %v1040 = vmul.f32 %v1036, %v1036
    %v1041 = vadd.f32 %v1037, %v1038
    %v1042 = vadd.f32 %v1041, %v1039
    %v1043 = vadd.f32 %v1042, %v1040
    %v1044 = vrot.slane %v1043, 4
    %v1045 = vadd.f32 %v1043, %v1044
    %v1046 = vrot.slane %v1045, 2
    %v1047 = vadd.f32 %v1045, %v1046
    %v1048 = vrot.slane %v1047, 1
    %v1049 = vadd.f32 %v1047, %v1048
    %v1050 = vmul.f32 %v1049, 0.035714287
    %v1051 = vadd.f32 %v1050, 1e-05
    %v1052 = vrsqrt.pop %v1051
    %v1053 = vmul.f32 %v989, %v1052
    %v1054 = vmul.f32 %v1028, %v1053
    %v1055 = vsub.f32 %v990, %v1054
    %v1057 = vlaneseq
    %v1058 = vshrl.u32 %v1057, 7
    %v1059 = vsub.s32 0, %v1058
    %v1060 = vrot.slane %v1053, %v1059
    %v1062 = vmul.f32 %v975, %v1060
    %v1063 = vmul.f32 %v978, %v1060
    %v1064 = vmul.f32 %v983, %v1060
    %v1065 = vmul.f32 %v986, %v1060
    %v1067 = vlaneseq
    %v1068 = vshrl.u32 %v1067, 7
    %v1069 = vsub.s32 0, %v1068
    %v1070 = vrot.slane %v1055, %v1069
    %v1072 = vadd.f32 %v1062, %v1070
    %v1073 = vadd.f32 %v1063, %v1070
    %v1074 = vadd.f32 %v1064, %v1070
    %v1075 = vadd.f32 %v1065, %v1070
    %v1076 = vmax.f32 %v1072, 0.0
    %v1077 = vmax.f32 %v1073, 0.0
    %v1078 = vmax.f32 %v1074, 0.0
    %v1079 = vmax.f32 %v1075, 0.0
    %1080 = vst [vmem:[#allocation3] sm:$0xff] %v1076
    %1081 = vst [vmem:[#allocation3 + $0x8] sm:$0xff] %v1077
    %1082 = vst [vmem:[#allocation3 + $0x10] sm:$0xff] %v1078
    %1083 = vst [vmem:[#allocation3 + $0x18] sm:$0xff] %v1079
    %v1084 = vld [vmem:[#allocation3] ss:$16 sm:$0x3]
    %s1085 = scalar_lea.vmem [#allocation3], 1
    %v1086 = vld [vmem:[%s1085] ss:$16 sm:$0x3]
    %v1087 = vmax.f32 %v1084, %v1086
    %s1088 = scalar_lea.vmem [#allocation3], 2
    %v1089 = vld [vmem:[%s1088] ss:$16 sm:$0x3]
    %v1090 = vmax.f32 %v1087, %v1089
    %s1091 = scalar_lea.vmem [#allocation3], 3
    %v1092 = vld [vmem:[%s1091] ss:$16 sm:$0x3]
    %v1093 = vmax.f32 %v1090, %v1092
    %s1094 = scalar_lea.vmem [#allocation3], 4
    %v1095 = vld [vmem:[%s1094] ss:$16 sm:$0x3]
    %s1096 = scalar_lea.vmem [#allocation3], 5
    %v1097 = vld [vmem:[%s1096] ss:$16 sm:$0x3]
    %v1098 = vmax.f32 %v1095, %v1097
    %s1099 = scalar_lea.vmem [#allocation3], 6
    %v1100 = vld [vmem:[%s1099] ss:$16 sm:$0x3]
    %v1101 = vmax.f32 %v1098, %v1100
    %s1102 = scalar_lea.vmem [#allocation3], 7
    %v1103 = vld [vmem:[%s1102] ss:$16 sm:$0x3]
    %v1104 = vmax.f32 %v1101, %v1103
    %s1105 = scalar_lea.vmem [#allocation3], 8
    %v1106 = vld [vmem:[%s1105] ss:$16 sm:$0x3]
    %s1107 = scalar_lea.vmem [#allocation3], 9
    %v1108 = vld [vmem:[%s1107] ss:$16 sm:$0x3]
    %v1109 = vmax.f32 %v1106, %v1108
    %s1110 = scalar_lea.vmem [#allocation3], 10
    %v1111 = vld [vmem:[%s1110] ss:$16 sm:$0x3]
    %v1112 = vmax.f32 %v1109, %v1111
    %s1113 = scalar_lea.vmem [#allocation3], 11
    %v1114 = vld [vmem:[%s1113] ss:$16 sm:$0x3]
    %v1115 = vmax.f32 %v1112, %v1114
    %v1116 = vpack.c.bf16 %v1093, %v1093
    %v1117 = vpack.c.bf16 %v1104, %v1104
    %v1118 = vpack.c.bf16 %v1115, %v1115
    %v1119 = vld [vmem:[#allocation15] sm:$0xf]
    %v1120 = vld [vmem:[#allocation15 + $0x4] sm:$0xf]
    %v1121 = vld [vmem:[#allocation15 + $0x8] sm:$0xf]
    %v1122 = vld [vmem:[#allocation15 + $0xc] sm:$0xf]
    %v1123 = vld [vmem:[#allocation15 + $0x10] sm:$0xf]
    %v1124 = vld [vmem:[#allocation15 + $0x14] sm:$0xf]
    %v1125 = vld [vmem:[#allocation15 + $0x18] sm:$0xf]
    %v1126 = vld [vmem:[#allocation15 + $0x1c] sm:$0xf]
    %v1127 = vld [vmem:[#allocation15 + $0x20] sm:$0xf]
    %v1128 = vld [vmem:[#allocation15 + $0x24] sm:$0xf]
    %v1129 = vld [vmem:[#allocation15 + $0x28] sm:$0xf]
    %v1130 = vld [vmem:[#allocation15 + $0x2c] sm:$0xf]
    %v1131 = vld [vmem:[#allocation15 + $0x30] sm:$0xf]
    %v1132 = vld [vmem:[#allocation15 + $0x34] sm:$0xf]
    %v1133 = vld [vmem:[#allocation15 + $0x38] sm:$0xf]
    %v1134 = vld [vmem:[#allocation15 + $0x3c] sm:$0xf]
    %v1135 = vld [vmem:[#allocation15 + $0x40] sm:$0xf]
    %v1136 = vld [vmem:[#allocation15 + $0x44] sm:$0xf]
    %v1137 = vld [vmem:[#allocation15 + $0x48] sm:$0xf]
    %v1138 = vld [vmem:[#allocation15 + $0x4c] sm:$0xf]
    %v1139 = vld [vmem:[#allocation15 + $0x50] sm:$0xf]
    %v1140 = vld [vmem:[#allocation15 + $0x54] sm:$0xf]
    %v1141 = vld [vmem:[#allocation15 + $0x58] sm:$0xf]
    %v1142 = vld [vmem:[#allocation15 + $0x5c] sm:$0xf]
    %v1143 = vld [vmem:[#allocation15 + $0x60] sm:$0xf]
    %v1144 = vld [vmem:[#allocation15 + $0x64] sm:$0xf]
    %v1145 = vld [vmem:[#allocation15 + $0x68] sm:$0xf]
    %v1146 = vld [vmem:[#allocation15 + $0x6c] sm:$0xf]
    %v1147 = vld [vmem:[#allocation15 + $0x70] sm:$0xf]
    %v1148 = vld [vmem:[#allocation15 + $0x74] sm:$0xf]
    %v1149 = vld [vmem:[#allocation15 + $0x78] sm:$0xf]
    %v1150 = vld [vmem:[#allocation15 + $0x7c] sm:$0xf]
    %v1151 = vld [vmem:[#allocation15 + $0x80] sm:$0xf]
    %v1152 = vld [vmem:[#allocation15 + $0x84] sm:$0xf]
    %v1153 = vld [vmem:[#allocation15 + $0x88] sm:$0xf]
    %v1154 = vld [vmem:[#allocation15 + $0x8c] sm:$0xf]
    %v1155 = vld [vmem:[#allocation15 + $0x90] sm:$0xf]
    %v1156 = vld [vmem:[#allocation15 + $0x94] sm:$0xf]
    %v1157 = vld [vmem:[#allocation15 + $0x98] sm:$0xf]
    %v1158 = vld [vmem:[#allocation15 + $0x9c] sm:$0xf]
    %v1159 = vld [vmem:[#allocation15 + $0xa0] sm:$0xf]
    %v1160 = vld [vmem:[#allocation15 + $0xa4] sm:$0xf]
    %v1161 = vld [vmem:[#allocation15 + $0xa8] sm:$0xf]
    %v1162 = vld [vmem:[#allocation15 + $0xac] sm:$0xf]
    %v1163 = vld [vmem:[#allocation15 + $0xb0] sm:$0xf]
    %v1164 = vld [vmem:[#allocation15 + $0xb4] sm:$0xf]
    %v1165 = vld [vmem:[#allocation15 + $0xb8] sm:$0xf]
    %v1166 = vld [vmem:[#allocation15 + $0xbc] sm:$0xf]
    %v1167 = vld [vmem:[#allocation17] sm:$0x1]
    %v1169 = vlaneseq
    %v1170 = vshrl.u32 %v1169, 7
    %v1171 = vsub.s32 0, %v1170
    %v1172 = vrot.slane %v1167, %v1171
    %v1222 = vunpack.c.l.b16 %v1119
    %v1223 = vunpack.c.l.b16 %v1120
    %v1224 = vunpack.c.l.b16 %v1121
    %v1225 = vunpack.c.l.b16 %v1122
    %v1226 = vunpack.c.l.b16 %v1123
    %v1227 = vunpack.c.l.b16 %v1124
    %v1228 = vunpack.c.l.b16 %v1125
    %v1229 = vunpack.c.l.b16 %v1126
    %v1230 = vunpack.c.l.b16 %v1127
    %v1231 = vunpack.c.l.b16 %v1128
    %v1232 = vunpack.c.l.b16 %v1129
    %v1233 = vunpack.c.l.b16 %v1130
    %v1234 = vunpack.c.l.b16 %v1131
    %v1235 = vunpack.c.l.b16 %v1132
    %v1236 = vunpack.c.l.b16 %v1133
    %v1237 = vunpack.c.l.b16 %v1134
    %v1238 = vunpack.c.l.b16 %v1135
    %v1239 = vunpack.c.l.b16 %v1136
    %v1240 = vunpack.c.l.b16 %v1137
    %v1241 = vunpack.c.l.b16 %v1138
    %v1242 = vunpack.c.l.b16 %v1139
    %v1243 = vunpack.c.l.b16 %v1140
    %v1244 = vunpack.c.l.b16 %v1141
    %v1245 = vunpack.c.l.b16 %v1142
    %v1246 = vunpack.c.l.b16 %v1143
    %v1247 = vunpack.c.l.b16 %v1144
    %v1248 = vunpack.c.l.b16 %v1145
    %v1249 = vunpack.c.l.b16 %v1146
    %v1250 = vunpack.c.l.b16 %v1147
    %v1251 = vunpack.c.l.b16 %v1148
    %v1252 = vunpack.c.l.b16 %v1149
    %v1253 = vunpack.c.l.b16 %v1150
    %v1254 = vunpack.c.l.b16 %v1151
    %v1255 = vunpack.c.l.b16 %v1152
    %v1256 = vunpack.c.l.b16 %v1153
    %v1257 = vunpack.c.l.b16 %v1154
    %v1258 = vunpack.c.l.b16 %v1155
    %v1259 = vunpack.c.l.b16 %v1156
    %v1260 = vunpack.c.l.b16 %v1157
    %v1261 = vunpack.c.l.b16 %v1158
    %v1262 = vunpack.c.l.b16 %v1159
    %v1263 = vunpack.c.l.b16 %v1160
    %v1264 = vunpack.c.l.b16 %v1161
    %v1265 = vunpack.c.l.b16 %v1162
    %v1266 = vunpack.c.l.b16 %v1163
    %v1267 = vunpack.c.l.b16 %v1164
    %v1268 = vunpack.c.l.b16 %v1165
    %v1269 = vunpack.c.l.b16 %v1166
    %v1270 = vpack.c.b16 %v1223, %v1222
    %v1271 = vpack.c.b16 %v1225, %v1224
    %v1272 = vpack.c.b16 %v1227, %v1226
    %v1273 = vpack.c.b16 %v1229, %v1228
    %v1274 = vpack.c.b16 %v1231, %v1230
    %v1275 = vpack.c.b16 %v1233, %v1232
    %v1276 = vpack.c.b16 %v1235, %v1234
    %v1277 = vpack.c.b16 %v1237, %v1236
    %v1278 = vpack.c.b16 %v1239, %v1238
    %v1279 = vpack.c.b16 %v1241, %v1240
    %v1280 = vpack.c.b16 %v1243, %v1242
    %v1281 = vpack.c.b16 %v1245, %v1244
    %v1282 = vpack.c.b16 %v1247, %v1246
    %v1283 = vpack.c.b16 %v1249, %v1248
    %v1284 = vpack.c.b16 %v1251, %v1250
    %v1285 = vpack.c.b16 %v1253, %v1252
    %v1286 = vpack.c.b16 %v1255, %v1254
    %v1287 = vpack.c.b16 %v1257, %v1256
    %v1288 = vpack.c.b16 %v1259, %v1258
    %v1289 = vpack.c.b16 %v1261, %v1260
    %v1290 = vpack.c.b16 %v1263, %v1262
    %v1291 = vpack.c.b16 %v1265, %v1264
    %v1292 = vpack.c.b16 %v1267, %v1266
    %v1293 = vpack.c.b16 %v1269, %v1268
    %1318 = vmatprep.subr.bf16.mxu0 0
    %1319 = vmatpush1.bf16.msra.mxu0 %v1277
    %1320 = vmatprep.subr.bf16.mxu0 0
    %1321 = vmatpush1.bf16.msra.mxu0 %v1276
    %1322 = vmatprep.subr.bf16.mxu0 0
    %1323 = vmatpush1.bf16.msra.mxu0 %v1275
    %1324 = vmatprep.subr.bf16.mxu0 0
    %1325 = vmatpush1.bf16.msra.mxu0 %v1274
    %1326 = vmatprep.subr.bf16.mxu0 0
    %1327 = vmatpush1.bf16.msra.mxu0 %v1273
    %1328 = vmatprep.subr.bf16.mxu0 0
    %1329 = vmatpush1.bf16.msra.mxu0 %v1272
    %1330 = vmatprep.subr.bf16.mxu0 0
    %1331 = vmatpush1.bf16.msra.mxu0 %v1271
    %1332 = vmatprep.subr.bf16.mxu0 0
    %1333 = vmatpush1.bf16.msra.mxu0 %v1270
    %1334 = vmatprep.subr.bf16.mxu0 0
    %1335 = vmatpush2.bf16.msra.mxu0 %v1285
    %1336 = vmatprep.subr.bf16.mxu0 0
    %1337 = vmatpush2.bf16.msra.mxu0 %v1284
    %1338 = vmatprep.subr.bf16.mxu0 0
    %1339 = vmatpush2.bf16.msra.mxu0 %v1283
    %1340 = vmatprep.subr.bf16.mxu0 0
    %1341 = vmatpush2.bf16.msra.mxu0 %v1282
    %1342 = vmatprep.subr.bf16.mxu0 0
    %1343 = vmatpush2.bf16.msra.mxu0 %v1281
    %1344 = vmatprep.subr.bf16.mxu0 0
    %1345 = vmatpush2.bf16.msra.mxu0 %v1280
    %1346 = vmatprep.subr.bf16.mxu0 0
    %1347 = vmatpush2.bf16.msra.mxu0 %v1279
    %1348 = vmatprep.subr.bf16.mxu0 0
    %1349 = vmatpush2.bf16.msra.mxu0 %v1278
    %1350 = vmatprep.mubr.bf16.mxu0 %v1117
    %1351 = vmatmul.mubr.bf16.gmra.mxu0 %v1116
    %v1352 = vpop.f32.mrf.mxu0
    %v1353 = vadd.f32 %v1172, %v1352
    %v1354 = vpop.f32.mrf.mxu0
    %v1355 = vpop.f32.mrf.mxu0
    %v1356 = vpop.f32.mrf.mxu0
    %1357 = vdwg.mxu0
    %1358 = vmatprep.subr.bf16.mxu0 0
    %1359 = vmatpush1.bf16.msra.mxu0 %v1293
    %1360 = vmatprep.subr.bf16.mxu0 0
    %1361 = vmatpush1.bf16.msra.mxu0 %v1292
    %1362 = vmatprep.subr.bf16.mxu0 0
    %1363 = vmatpush1.bf16.msra.mxu0 %v1291
    %1364 = vmatprep.subr.bf16.mxu0 0
    %1365 = vmatpush1.bf16.msra.mxu0 %v1290
    %1366 = vmatprep.subr.bf16.mxu0 0
    %1367 = vmatpush1.bf16.msra.mxu0 %v1289
    %1368 = vmatprep.subr.bf16.mxu0 0
    %1369 = vmatpush1.bf16.msra.mxu0 %v1288
    %1370 = vmatprep.subr.bf16.mxu0 0
    %1371 = vmatpush1.bf16.msra.mxu0 %v1287
    %1372 = vmatprep.subr.bf16.mxu0 0
    %1373 = vmatpush1.bf16.msra.mxu0 %v1286
    %1374 = vmatprep.subr.bf16.mxu0 0
    %1375 = vmatpush2.bf16.msra.mxu0 0
    %1376 = vmatprep.subr.bf16.mxu0 0
    %1377 = vmatpush2.bf16.msra.mxu0 0
    %1378 = vmatprep.subr.bf16.mxu0 0
    %1379 = vmatpush2.bf16.msra.mxu0 0
    %1380 = vmatprep.subr.bf16.mxu0 0
    %1381 = vmatpush2.bf16.msra.mxu0 0
    %1382 = vmatprep.subr.bf16.mxu0 0
    %1383 = vmatpush2.bf16.msra.mxu0 0
    %1384 = vmatprep.subr.bf16.mxu0 0
    %1385 = vmatpush2.bf16.msra.mxu0 0
    %1386 = vmatprep.subr.bf16.mxu0 0
    %1387 = vmatpush2.bf16.msra.mxu0 0
    %1388 = vmatprep.subr.bf16.mxu0 0
    %1389 = vmatpush2.bf16.msra.mxu0 0
    %1390 = vmatprep.mubr.bf16.mxu0 0
    %1391 = vmatmul.mubr.bf16.gmra.mxu0 %v1118
    %v1392 = vpop.f32.mrf.mxu0
    %v1393 = vadd.f32 %v1353, %v1392
    %v1394 = vpop.f32.mrf.mxu0
    %v1395 = vpop.f32.mrf.mxu0
    %v1396 = vpop.f32.mrf.mxu0
    %1397 = vdwg.mxu0
    %vm1398 = vcmask 1041408
    %v1399 = vsel %vm1398, %v1393, 0.0
    %v1400 = vtanh.pop %v1399
    %v1401 = vpack.c.bf16 %v1400, %v1400
    %v1402 = vld [vmem:[%s12] sm:$0xf]
    %v1403 = vld [vmem:[%s12 + $0x4] sm:$0xf]
    %v1404 = vld [vmem:[%s12 + $0x8] sm:$0xf]
    %v1405 = vld [vmem:[%s12 + $0xc] sm:$0xf]
    %v1406 = vld [vmem:[%s12 + $0x10] sm:$0xf]
    %v1407 = vld [vmem:[%s12 + $0x14] sm:$0xf]
    %v1408 = vld [vmem:[%s12 + $0x18] sm:$0xf]
    %v1409 = vld [vmem:[%s12 + $0x1c] sm:$0xf]
    %v1410 = vld [vmem:[%s12 + $0x20] sm:$0xf]
    %v1411 = vld [vmem:[%s12 + $0x24] sm:$0xf]
    %v1412 = vld [vmem:[%s12 + $0x28] sm:$0xf]
    %v1413 = vld [vmem:[%s12 + $0x2c] sm:$0xf]
    %v1414 = vld [vmem:[%s12 + $0x30] sm:$0xf]
    %v1415 = vld [vmem:[%s12 + $0x34] sm:$0xf]
    %v1416 = vld [vmem:[%s12 + $0x38] sm:$0xf]
    %v1417 = vld [vmem:[%s12 + $0x3c] sm:$0xf]
    %v1418 = vld [vmem:[#allocation18] sm:$0x1]
    %v1420 = vlaneseq
    %v1421 = vshrl.u32 %v1420, 7
    %v1422 = vsub.s32 0, %v1421
    %v1423 = vrot.slane %v1418, %v1422
    %v1441 = vunpack.c.l.b16 %v1402
    %v1442 = vunpack.c.l.b16 %v1403
    %v1443 = vunpack.c.l.b16 %v1404
    %v1444 = vunpack.c.l.b16 %v1405
    %v1445 = vunpack.c.l.b16 %v1406
    %v1446 = vunpack.c.l.b16 %v1407
    %v1447 = vunpack.c.l.b16 %v1408
    %v1448 = vunpack.c.l.b16 %v1409
    %v1449 = vunpack.c.l.b16 %v1410
    %v1450 = vunpack.c.l.b16 %v1411
    %v1451 = vunpack.c.l.b16 %v1412
    %v1452 = vunpack.c.l.b16 %v1413
    %v1453 = vunpack.c.l.b16 %v1414
    %v1454 = vunpack.c.l.b16 %v1415
    %v1455 = vunpack.c.l.b16 %v1416
    %v1456 = vunpack.c.l.b16 %v1417
    %v1457 = vpack.c.b16 %v1442, %v1441
    %v1458 = vpack.c.b16 %v1444, %v1443
    %v1459 = vpack.c.b16 %v1446, %v1445
    %v1460 = vpack.c.b16 %v1448, %v1447
    %v1461 = vpack.c.b16 %v1450, %v1449
    %v1462 = vpack.c.b16 %v1452, %v1451
    %v1463 = vpack.c.b16 %v1454, %v1453
    %v1464 = vpack.c.b16 %v1456, %v1455
    %1473 = vmatprep.subr.bf16.mxu0 0
    %1474 = vmatpush1.bf16.msra.mxu0 %v1464
    %1475 = vmatprep.subr.bf16.mxu0 0
    %1476 = vmatpush1.bf16.msra.mxu0 %v1463
    %1477 = vmatprep.subr.bf16.mxu0 0
    %1478 = vmatpush1.bf16.msra.mxu0 %v1462
    %1479 = vmatprep.subr.bf16.mxu0 0
    %1480 = vmatpush1.bf16.msra.mxu0 %v1461
    %1481 = vmatprep.subr.bf16.mxu0 0
    %1482 = vmatpush1.bf16.msra.mxu0 %v1460
    %1483 = vmatprep.subr.bf16.mxu0 0
    %1484 = vmatpush1.bf16.msra.mxu0 %v1459
    %1485 = vmatprep.subr.bf16.mxu0 0
    %1486 = vmatpush1.bf16.msra.mxu0 %v1458
    %1487 = vmatprep.subr.bf16.mxu0 0
    %1488 = vmatpush1.bf16.msra.mxu0 %v1457
    %1489 = vmatprep.subr.bf16.mxu0 0
    %1490 = vmatpush2.bf16.msra.mxu0 0
    %1491 = vmatprep.subr.bf16.mxu0 0
    %1492 = vmatpush2.bf16.msra.mxu0 0
    %1493 = vmatprep.subr.bf16.mxu0 0
    %1494 = vmatpush2.bf16.msra.mxu0 0
    %1495 = vmatprep.subr.bf16.mxu0 0
    %1496 = vmatpush2.bf16.msra.mxu0 0
    %1497 = vmatprep.subr.bf16.mxu0 0
    %1498 = vmatpush2.bf16.msra.mxu0 0
    %1499 = vmatprep.subr.bf16.mxu0 0
    %1500 = vmatpush2.bf16.msra.mxu0 0
    %1501 = vmatprep.subr.bf16.mxu0 0
    %1502 = vmatpush2.bf16.msra.mxu0 0
    %1503 = vmatprep.subr.bf16.mxu0 0
    %1504 = vmatpush2.bf16.msra.mxu0 0
    %1505 = vmatprep.mubr.bf16.mxu0 0
    %1506 = vmatmul.mubr.bf16.gmra.mxu0 %v1401
    %v1507 = vpop.f32.mrf.mxu0
    %v1508 = vadd.f32 %v1423, %v1507
    %v1509 = vpop.f32.mrf.mxu0
    %v1510 = vpop.f32.mrf.mxu0
    %v1511 = vpop.f32.mrf.mxu0
    %1512 = vdwg.mxu0
    %v1513 = vtanh.pop %v1508
    %v1514 = vpack.c.bf16 %v1513, %v1513
    %v1515 = vld [vmem:[#allocation20] sm:$0xf]
    %v1516 = vld [vmem:[#allocation20 + $0x4] sm:$0xf]
    %v1517 = vld [vmem:[#allocation20 + $0x8] sm:$0xf]
    %v1518 = vld [vmem:[#allocation20 + $0xc] sm:$0xf]
    %v1519 = vld [vmem:[#allocation20 + $0x10] sm:$0xf]
    %v1520 = vld [vmem:[#allocation20 + $0x14] sm:$0xf]
    %v1521 = vld [vmem:[#allocation20 + $0x18] sm:$0xf]
    %v1522 = vld [vmem:[#allocation20 + $0x1c] sm:$0xf]
    %v1523 = vld [vmem:[#allocation20 + $0x20] sm:$0xf]
    %v1524 = vld [vmem:[#allocation20 + $0x24] sm:$0xf]
    %v1525 = vld [vmem:[#allocation20 + $0x28] sm:$0xf]
    %v1526 = vld [vmem:[#allocation20 + $0x2c] sm:$0xf]
    %v1527 = vld [vmem:[#allocation20 + $0x30] sm:$0xf]
    %v1528 = vld [vmem:[#allocation20 + $0x34] sm:$0xf]
    %v1529 = vld [vmem:[#allocation20 + $0x38] sm:$0xf]
    %v1530 = vld [vmem:[#allocation20 + $0x3c] sm:$0xf]
    %v1531 = vld [vmem:[#allocation21] sm:$0x1]
    %v1533 = vlaneseq
    %v1534 = vshrl.u32 %v1533, 7
    %v1535 = vsub.s32 0, %v1534
    %v1536 = vrot.slane %v1531, %v1535
    %v1554 = vunpack.c.l.b16 %v1515
    %v1555 = vunpack.c.l.b16 %v1516
    %v1556 = vunpack.c.l.b16 %v1517
    %v1557 = vunpack.c.l.b16 %v1518
    %v1558 = vunpack.c.l.b16 %v1519
    %v1559 = vunpack.c.l.b16 %v1520
    %v1560 = vunpack.c.l.b16 %v1521
    %v1561 = vunpack.c.l.b16 %v1522
    %v1562 = vunpack.c.l.b16 %v1523
    %v1563 = vunpack.c.l.b16 %v1524
    %v1564 = vunpack.c.l.b16 %v1525
    %v1565 = vunpack.c.l.b16 %v1526
    %v1566 = vunpack.c.l.b16 %v1527
    %v1567 = vunpack.c.l.b16 %v1528
    %v1568 = vunpack.c.l.b16 %v1529
    %v1569 = vunpack.c.l.b16 %v1530
    %v1570 = vpack.c.b16 %v1555, %v1554
    %v1571 = vpack.c.b16 %v1557, %v1556
    %v1572 = vpack.c.b16 %v1559, %v1558
    %v1573 = vpack.c.b16 %v1561, %v1560
    %v1574 = vpack.c.b16 %v1563, %v1562
    %v1575 = vpack.c.b16 %v1565, %v1564
    %v1576 = vpack.c.b16 %v1567, %v1566
    %v1577 = vpack.c.b16 %v1569, %v1568
    %1586 = vmatprep.subr.bf16.mxu0 0
    %1587 = vmatpush1.bf16.msra.mxu0 %v1577
    %1588 = vmatprep.subr.bf16.mxu0 0
    %1589 = vmatpush1.bf16.msra.mxu0 %v1576
    %1590 = vmatprep.subr.bf16.mxu0 0
    %1591 = vmatpush1.bf16.msra.mxu0 %v1575
    %1592 = vmatprep.subr.bf16.mxu0 0
    %1593 = vmatpush1.bf16.msra.mxu0 %v1574
    %1594 = vmatprep.subr.bf16.mxu0 0
    %1595 = vmatpush1.bf16.msra.mxu0 %v1573
    %1596 = vmatprep.subr.bf16.mxu0 0
    %1597 = vmatpush1.bf16.msra.mxu0 %v1572
    %1598 = vmatprep.subr.bf16.mxu0 0
    %1599 = vmatpush1.bf16.msra.mxu0 %v1571
    %1600 = vmatprep.subr.bf16.mxu0 0
    %1601 = vmatpush1.bf16.msra.mxu0 %v1570
    %1602 = vmatprep.subr.bf16.mxu0 0
    %1603 = vmatpush2.bf16.msra.mxu0 0
    %1604 = vmatprep.subr.bf16.mxu0 0
    %1605 = vmatpush2.bf16.msra.mxu0 0
    %1606 = vmatprep.subr.bf16.mxu0 0
    %1607 = vmatpush2.bf16.msra.mxu0 0
    %1608 = vmatprep.subr.bf16.mxu0 0
    %1609 = vmatpush2.bf16.msra.mxu0 0
    %1610 = vmatprep.subr.bf16.mxu0 0
    %1611 = vmatpush2.bf16.msra.mxu0 0
    %1612 = vmatprep.subr.bf16.mxu0 0
    %1613 = vmatpush2.bf16.msra.mxu0 0
    %1614 = vmatprep.subr.bf16.mxu0 0
    %1615 = vmatpush2.bf16.msra.mxu0 0
    %1616 = vmatprep.subr.bf16.mxu0 0
    %1617 = vmatpush2.bf16.msra.mxu0 0
    %1618 = vmatprep.mubr.bf16.mxu0 0
    %1619 = vmatmul.mubr.bf16.gmra.mxu0 %v1514
    %v1620 = vpop.f32.mrf.mxu0
    %v1621 = vadd.f32 %v1536, %v1620
    %v1622 = vpop.f32.mrf.mxu0
    %v1623 = vpop.f32.mrf.mxu0
    %v1624 = vpop.f32.mrf.mxu0
    %1625 = vdwg.mxu0
    %v1626 = vtanh.pop %v1621
    %v1627 = vpack.c.bf16 %v1626, %v1626
    %v1628 = vld [vmem:[#allocation23] sm:$0xff]
    %v1629 = vld [vmem:[#allocation23 + $0x8] sm:$0xff]
    %v1630 = vld [vmem:[#allocation23 + $0x10] sm:$0xff]
    %v1631 = vld [vmem:[#allocation23 + $0x18] sm:$0xff]
    %v1632 = vld [vmem:[#allocation23 + $0x20] sm:$0xff]
    %v1633 = vld [vmem:[#allocation23 + $0x28] sm:$0xff]
    %v1634 = vld [vmem:[#allocation23 + $0x30] sm:$0xff]
    %v1635 = vld [vmem:[#allocation23 + $0x38] sm:$0xff]
    %v1636 = vld [vmem:[#allocation23 + $0x40] sm:$0xff]
    %v1637 = vld [vmem:[#allocation23 + $0x48] sm:$0xff]
    %v1638 = vld [vmem:[#allocation23 + $0x50] sm:$0xff]
    %v1639 = vld [vmem:[#allocation23 + $0x58] sm:$0xff]
    %v1640 = vld [vmem:[#allocation23 + $0x60] sm:$0xff]
    %v1641 = vld [vmem:[#allocation23 + $0x68] sm:$0xff]
    %v1642 = vld [vmem:[#allocation23 + $0x70] sm:$0xff]
    %v1643 = vld [vmem:[#allocation23 + $0x78] sm:$0xff]
    %v1644 = vld [vmem:[#allocation24] sm:$0x3]
    %v1646 = vlaneseq
    %v1647 = vshrl.u32 %v1646, 7
    %v1648 = vsub.s32 0, %v1647
    %v1649 = vrot.slane %v1644, %v1648
    %v1650 = vlaneseq
    %v1651 = vshrl.u32 %v1650, 7
    %v1652 = vsub.s32 1, %v1651
    %v1653 = vrot.slane %v1644, %v1652
    %v1672 = vunpack.c.l.b16 %v1628
    %v1673 = vunpack.c.h.b16 %v1628
    %v1674 = vunpack.c.l.b16 %v1629
    %v1675 = vunpack.c.h.b16 %v1629
    %v1676 = vunpack.c.l.b16 %v1630
    %v1677 = vunpack.c.h.b16 %v1630
    %v1678 = vunpack.c.l.b16 %v1631
    %v1679 = vunpack.c.h.b16 %v1631
    %v1680 = vunpack.c.l.b16 %v1632
    %v1681 = vunpack.c.h.b16 %v1632
    %v1682 = vunpack.c.l.b16 %v1633
    %v1683 = vunpack.c.h.b16 %v1633
    %v1684 = vunpack.c.l.b16 %v1634
    %v1685 = vunpack.c.h.b16 %v1634
    %v1686 = vunpack.c.l.b16 %v1635
    %v1687 = vunpack.c.h.b16 %v1635
    %v1688 = vunpack.c.l.b16 %v1636
    %v1689 = vunpack.c.h.b16 %v1636
    %v1690 = vunpack.c.l.b16 %v1637
    %v1691 = vunpack.c.h.b16 %v1637
    %v1692 = vunpack.c.l.b16 %v1638
    %v1693 = vunpack.c.h.b16 %v1638
    %v1694 = vunpack.c.l.b16 %v1639
    %v1695 = vunpack.c.h.b16 %v1639
    %v1696 = vunpack.c.l.b16 %v1640
    %v1697 = vunpack.c.h.b16 %v1640
    %v1698 = vunpack.c.l.b16 %v1641
    %v1699 = vunpack.c.h.b16 %v1641
    %v1700 = vunpack.c.l.b16 %v1642
    %v1701 = vunpack.c.h.b16 %v1642
    %v1702 = vunpack.c.l.b16 %v1643
    %v1703 = vunpack.c.h.b16 %v1643
    %v1704 = vpack.c.b16 %v1674, %v1672
    %v1705 = vpack.c.b16 %v1675, %v1673
    %v1706 = vpack.c.b16 %v1678, %v1676
    %v1707 = vpack.c.b16 %v1679, %v1677
    %v1708 = vpack.c.b16 %v1682, %v1680
    %v1709 = vpack.c.b16 %v1683, %v1681
    %v1710 = vpack.c.b16 %v1686, %v1684
    %v1711 = vpack.c.b16 %v1687, %v1685
    %v1712 = vpack.c.b16 %v1690, %v1688
    %v1713 = vpack.c.b16 %v1691, %v1689
    %v1714 = vpack.c.b16 %v1694, %v1692
    %v1715 = vpack.c.b16 %v1695, %v1693
    %v1716 = vpack.c.b16 %v1698, %v1696
    %v1717 = vpack.c.b16 %v1699, %v1697
    %v1718 = vpack.c.b16 %v1702, %v1700
    %v1719 = vpack.c.b16 %v1703, %v1701
    %1736 = vmatprep.subr.bf16.mxu0 %v1719
    %1737 = vmatpush1.bf16.msra.mxu0 %v1718
    %1738 = vmatprep.subr.bf16.mxu0 %v1717
    %1739 = vmatpush1.bf16.msra.mxu0 %v1716
    %1740 = vmatprep.subr.bf16.mxu0 %v1715
    %1741 = vmatpush1.bf16.msra.mxu0 %v1714
    %1742 = vmatprep.subr.bf16.mxu0 %v1713
    %1743 = vmatpush1.bf16.msra.mxu0 %v1712
    %1744 = vmatprep.subr.bf16.mxu0 %v1711
    %1745 = vmatpush1.bf16.msra.mxu0 %v1710
    %1746 = vmatprep.subr.bf16.mxu0 %v1709
    %1747 = vmatpush1.bf16.msra.mxu0 %v1708
    %1748 = vmatprep.subr.bf16.mxu0 %v1707
    %1749 = vmatpush1.bf16.msra.mxu0 %v1706
    %1750 = vmatprep.subr.bf16.mxu0 %v1705
    %1751 = vmatpush1.bf16.msra.mxu0 %v1704
    %1752 = vmatprep.subr.bf16.mxu0 0
    %1753 = vmatpush2.bf16.msra.mxu0 0
    %1754 = vmatprep.subr.bf16.mxu0 0
    %1755 = vmatpush2.bf16.msra.mxu0 0
    %1756 = vmatprep.subr.bf16.mxu0 0
    %1757 = vmatpush2.bf16.msra.mxu0 0
    %1758 = vmatprep.subr.bf16.mxu0 0
    %1759 = vmatpush2.bf16.msra.mxu0 0
    %1760 = vmatprep.subr.bf16.mxu0 0
    %1761 = vmatpush2.bf16.msra.mxu0 0
    %1762 = vmatprep.subr.bf16.mxu0 0
    %1763 = vmatpush2.bf16.msra.mxu0 0
    %1764 = vmatprep.subr.bf16.mxu0 0
    %1765 = vmatpush2.bf16.msra.mxu0 0
    %1766 = vmatprep.subr.bf16.mxu0 0
    %1767 = vmatpush2.bf16.msra.mxu0 0
    %1768 = vmatprep.mubr.bf16.mxu0 0
    %1769 = vmatmul.mubr.bf16.gmra.mxu0 %v1627
    %v1770 = vpop.f32.mrf.mxu0
    %v1771 = vadd.f32 %v1649, %v1770
    %v1772 = vpop.f32.mrf.mxu0
    %v1773 = vadd.f32 %v1653, %v1772
    %v1774 = vpop.f32.mrf.mxu0
    %v1775 = vpop.f32.mrf.mxu0
    %1776 = vdwg.mxu0
    %v1777 = vtanh.pop %v1771
    %v1778 = vtanh.pop %v1773
    %v1779 = vpack.c.bf16 %v1777, %v1777
    %v1780 = vpack.c.bf16 %v1778, %v1778
    %v1781 = vld [vmem:[#allocation26] sm:$0xf]
    %v1782 = vld [vmem:[#allocation26 + $0x4] sm:$0xf]
    %v1783 = vld [vmem:[#allocation26 + $0x8] sm:$0xf]
    %v1784 = vld [vmem:[#allocation26 + $0xc] sm:$0xf]
    %v1785 = vld [vmem:[#allocation26 + $0x10] sm:$0xf]
    %v1786 = vld [vmem:[#allocation26 + $0x14] sm:$0xf]
    %v1787 = vld [vmem:[#allocation26 + $0x18] sm:$0xf]
    %v1788 = vld [vmem:[#allocation26 + $0x1c] sm:$0xf]
    %v1789 = vld [vmem:[#allocation26 + $0x20] sm:$0xf]
    %v1790 = vld [vmem:[#allocation26 + $0x24] sm:$0xf]
    %v1791 = vld [vmem:[#allocation26 + $0x28] sm:$0xf]
    %v1792 = vld [vmem:[#allocation26 + $0x2c] sm:$0xf]
    %v1793 = vld [vmem:[#allocation26 + $0x30] sm:$0xf]
    %v1794 = vld [vmem:[#allocation26 + $0x34] sm:$0xf]
    %v1795 = vld [vmem:[#allocation26 + $0x38] sm:$0xf]
    %v1796 = vld [vmem:[#allocation26 + $0x3c] sm:$0xf]
    %v1797 = vld [vmem:[#allocation26 + $0x40] sm:$0xf]
    %v1798 = vld [vmem:[#allocation26 + $0x44] sm:$0xf]
    %v1799 = vld [vmem:[#allocation26 + $0x48] sm:$0xf]
    %v1800 = vld [vmem:[#allocation26 + $0x4c] sm:$0xf]
    %v1801 = vld [vmem:[#allocation26 + $0x50] sm:$0xf]
    %v1802 = vld [vmem:[#allocation26 + $0x54] sm:$0xf]
    %v1803 = vld [vmem:[#allocation26 + $0x58] sm:$0xf]
    %v1804 = vld [vmem:[#allocation26 + $0x5c] sm:$0xf]
    %v1805 = vld [vmem:[#allocation26 + $0x60] sm:$0xf]
    %v1806 = vld [vmem:[#allocation26 + $0x64] sm:$0xf]
    %v1807 = vld [vmem:[#allocation26 + $0x68] sm:$0xf]
    %v1808 = vld [vmem:[#allocation26 + $0x6c] sm:$0xf]
    %v1809 = vld [vmem:[#allocation26 + $0x70] sm:$0xf]
    %v1810 = vld [vmem:[#allocation26 + $0x74] sm:$0xf]
    %v1811 = vld [vmem:[#allocation26 + $0x78] sm:$0xf]
    %v1812 = vld [vmem:[#allocation26 + $0x7c] sm:$0xf]
    %v1813 = vld [vmem:[#allocation27] sm:$0x1]
    %v1815 = vlaneseq
    %v1816 = vshrl.u32 %v1815, 7
    %v1817 = vsub.s32 0, %v1816
    %v1818 = vrot.slane %v1813, %v1817
    %v1852 = vunpack.c.l.b16 %v1781
    %v1853 = vunpack.c.l.b16 %v1782
    %v1854 = vunpack.c.l.b16 %v1783
    %v1855 = vunpack.c.l.b16 %v1784
    %v1856 = vunpack.c.l.b16 %v1785
    %v1857 = vunpack.c.l.b16 %v1786
    %v1858 = vunpack.c.l.b16 %v1787
    %v1859 = vunpack.c.l.b16 %v1788
    %v1860 = vunpack.c.l.b16 %v1789
    %v1861 = vunpack.c.l.b16 %v1790
    %v1862 = vunpack.c.l.b16 %v1791
    %v1863 = vunpack.c.l.b16 %v1792
    %v1864 = vunpack.c.l.b16 %v1793
    %v1865 = vunpack.c.l.b16 %v1794
    %v1866 = vunpack.c.l.b16 %v1795
    %v1867 = vunpack.c.l.b16 %v1796
    %v1868 = vunpack.c.l.b16 %v1797
    %v1869 = vunpack.c.l.b16 %v1798
    %v1870 = vunpack.c.l.b16 %v1799
    %v1871 = vunpack.c.l.b16 %v1800
    %v1872 = vunpack.c.l.b16 %v1801
    %v1873 = vunpack.c.l.b16 %v1802
    %v1874 = vunpack.c.l.b16 %v1803
    %v1875 = vunpack.c.l.b16 %v1804
    %v1876 = vunpack.c.l.b16 %v1805
    %v1877 = vunpack.c.l.b16 %v1806
    %v1878 = vunpack.c.l.b16 %v1807
    %v1879 = vunpack.c.l.b16 %v1808
    %v1880 = vunpack.c.l.b16 %v1809
    %v1881 = vunpack.c.l.b16 %v1810
    %v1882 = vunpack.c.l.b16 %v1811
    %v1883 = vunpack.c.l.b16 %v1812
    %v1884 = vpack.c.b16 %v1853, %v1852
    %v1885 = vpack.c.b16 %v1855, %v1854
    %v1886 = vpack.c.b16 %v1857, %v1856
    %v1887 = vpack.c.b16 %v1859, %v1858
    %v1888 = vpack.c.b16 %v1861, %v1860
    %v1889 = vpack.c.b16 %v1863, %v1862
    %v1890 = vpack.c.b16 %v1865, %v1864
    %v1891 = vpack.c.b16 %v1867, %v1866
    %v1892 = vpack.c.b16 %v1869, %v1868
    %v1893 = vpack.c.b16 %v1871, %v1870
    %v1894 = vpack.c.b16 %v1873, %v1872
    %v1895 = vpack.c.b16 %v1875, %v1874
    %v1896 = vpack.c.b16 %v1877, %v1876
    %v1897 = vpack.c.b16 %v1879, %v1878
    %v1898 = vpack.c.b16 %v1881, %v1880
    %v1899 = vpack.c.b16 %v1883, %v1882
    %1916 = vmatprep.subr.bf16.mxu0 0
    %1917 = vmatpush1.bf16.msra.mxu0 %v1891
    %1918 = vmatprep.subr.bf16.mxu0 0
    %1919 = vmatpush1.bf16.msra.mxu0 %v1890
    %1920 = vmatprep.subr.bf16.mxu0 0
    %1921 = vmatpush1.bf16.msra.mxu0 %v1889
    %1922 = vmatprep.subr.bf16.mxu0 0
    %1923 = vmatpush1.bf16.msra.mxu0 %v1888
    %1924 = vmatprep.subr.bf16.mxu0 0
    %1925 = vmatpush1.bf16.msra.mxu0 %v1887
    %1926 = vmatprep.subr.bf16.mxu0 0
    %1927 = vmatpush1.bf16.msra.mxu0 %v1886
    %1928 = vmatprep.subr.bf16.mxu0 0
    %1929 = vmatpush1.bf16.msra.mxu0 %v1885
    %1930 = vmatprep.subr.bf16.mxu0 0
    %1931 = vmatpush1.bf16.msra.mxu0 %v1884
    %1932 = vmatprep.subr.bf16.mxu0 0
    %1933 = vmatpush2.bf16.msra.mxu0 %v1899
    %1934 = vmatprep.subr.bf16.mxu0 0
    %1935 = vmatpush2.bf16.msra.mxu0 %v1898
    %1936 = vmatprep.subr.bf16.mxu0 0
    %1937 = vmatpush2.bf16.msra.mxu0 %v1897
    %1938 = vmatprep.subr.bf16.mxu0 0
    %1939 = vmatpush2.bf16.msra.mxu0 %v1896
    %1940 = vmatprep.subr.bf16.mxu0 0
    %1941 = vmatpush2.bf16.msra.mxu0 %v1895
    %1942 = vmatprep.subr.bf16.mxu0 0
    %1943 = vmatpush2.bf16.msra.mxu0 %v1894
    %1944 = vmatprep.subr.bf16.mxu0 0
    %1945 = vmatpush2.bf16.msra.mxu0 %v1893
    %1946 = vmatprep.subr.bf16.mxu0 0
    %1947 = vmatpush2.bf16.msra.mxu0 %v1892
    %1948 = vmatprep.mubr.bf16.mxu0 %v1780
    %1949 = vmatmul.mubr.bf16.gmra.mxu0 %v1779
    %v1950 = vpop.f32.mrf.mxu0
    %v1951 = vadd.f32 %v1818, %v1950
    %v1952 = vpop.f32.mrf.mxu0
    %v1953 = vpop.f32.mrf.mxu0
    %v1954 = vpop.f32.mrf.mxu0
    %1955 = vdwg.mxu0
    %v1956 = vlaneseq
    %v1957 = vand.u32 %v1956, 127
    %vm1958 = vcmp.lt.s32.totalorder %v1957, 35
    %v1959 = vsel %vm1958, %v1951, -1e+30
    %1960 = vmax.xlane.f32.xlu0 %v1959
    %v1961 = vpop.xlane.xlu0 %1960
    %v1962 = vsub.f32 %v1959, %v1961
    %v1963 = vmul.f32 %v1962, 1.442695
    %v1964 = vpow.pop %v1963
    %1965 = vadd.xlane.f32.xlu0 %v1964
    %v1966 = vpop.xlane.xlu0 %1965
    %v1967 = vlog2.pop %v1966
    %v1968 = vmul.f32 %v1967, 0.6931472
    %v1969 = vsub.f32 %v1962, %v1968
    %1970 = vst [vmem:[%s20] sm:$0xff] %v1969
    // Predicated region
    $region146: #{m1_forward.1} parent=1 // pred_check
      _
    $region147: #{m1_forward.1} parent=1 // pred_check_branch
      %1972 = sbr.rel (0) target = $region149
    $region148: #{m1_forward.1} parent=1 // pred_region
      _
    $region149: #{m1_forward.1} parent=1 // pred_fallthru
      _
    // Predicated region
    $region150: #{m1_forward.1} parent=1 // pred_check
      _
    $region151: #{m1_forward.1} parent=1 // pred_check_branch
      %1974 = sbr.rel (0) target = $region153
    $region152: #{m1_forward.1} parent=1 // pred_region
      _
    $region153: #{m1_forward.1} parent=1 // pred_fallthru
      _
    %1975 = vsyncpa [#allocation5], 1
    %1976 = vsyncpa [#allocation7], 1
    %1977 = vsyncpa [#allocation10], 1
    %1978 = vsyncpa [#allocation13], 1
    %1979 = vsyncpa [#allocation16], 1
    %1980 = vsyncpa [#allocation19], 1
    %1981 = vsyncpa [#allocation22], 1
    %1982 = vsyncpa [#allocation25], 1
    %1983 = vsyncpa [#allocation28], 1

</llo_original>
